<compile_context>
chip_gen: v7x
topology: tpu7x:2x2x1
jax: 0.10.0
libtpu: 0.0.40
codegen_flags: <defaults>
</compile_context>

<pallas_src>
import jax
import jax.numpy as jnp
from jax import lax
from jax.experimental import pallas as pl
from jax.experimental.pallas import tpu as pltpu

EPS = 1e-5
LANES = 128


def net_kernel(x_ref, w1_ref, w2_ref, w3_ref, bias_ref, out_ref):
    # x: [TB, 784] bf16; w1: [784,128] bf16; w2,w3: [128,128] bf16 (BN folded,
    # zero-padded); bias: [3,128] f32 rows = (b1, b2_folded_pad, b3_folded_pad).
    x = x_ref[...]
    b = bias_ref[...]

    # fc1 + relu   (BN1 is folded into fc2, dropout is identity in eval)
    h1 = jnp.dot(x, w1_ref[...], preferred_element_type=jnp.float32)
    h1 = jnp.maximum(h1 + b[0:1, :], 0.0)                       # [TB, 128] f32

    # fc2' (= BN1 folded into fc2) + relu
    h2 = jnp.dot(h1.astype(jnp.bfloat16), w2_ref[...],
                 preferred_element_type=jnp.float32)
    h2 = jnp.maximum(h2 + b[1:2, :], 0.0)                       # [TB, 128] f32

    # fc3' (= BN2 folded into fc3)
    out = jnp.dot(h2.astype(jnp.bfloat16), w3_ref[...],
                  preferred_element_type=jnp.float32)
    out_ref[...] = out + b[2:3, :]                              # [TB, 128] f32


def fold_and_pack_params(p):
    """Fold eval-mode BN into the downstream Linear layers, pad to 128 lanes,
    cast matmul operands to bf16, and pack biases into one (3,128) operand."""
    s1 = p["g1"] * lax.rsqrt(p["v1"] + EPS)          # (1,128)
    t1 = p["be1"] - p["m1"] * s1                     # (1,128)
    s2 = p["g2"] * lax.rsqrt(p["v2"] + EPS)          # (1,64)
    t2 = p["be2"] - p["m2"] * s2                     # (1,64)

    # BN1 folded into fc2:  (h1*s1 + t1) @ w2 + b2 == h1 @ (s1^T*w2) + (t1@w2+b2)
    w2f = p["w2"] * s1.reshape(-1, 1)                # (128,64)
    b2f = t1 @ p["w2"] + p["b2"]                     # (1,64)
    # BN2 folded into fc3
    w3f = p["w3"] * s2.reshape(-1, 1)                # (64,10)
    b3f = t2 @ p["w3"] + p["b3"]                     # (1,10)

    # Zero-pad hidden-2 and output feature dims to a full 128-lane width.
    w2p = jnp.zeros((128, LANES), jnp.float32).at[:, :64].set(w2f)
    b2p = jnp.zeros((1, LANES), jnp.float32).at[:, :64].set(b2f)
    w3p = jnp.zeros((LANES, LANES), jnp.float32).at[:64, :10].set(w3f)
    b3p = jnp.zeros((1, LANES), jnp.float32).at[:, :10].set(b3f)

    biases = jnp.concatenate([p["b1"], b2p, b3p], axis=0)       # (3,128) f32

    return (p["w1"].astype(jnp.bfloat16),
            w2p.astype(jnp.bfloat16),
            w3p.astype(jnp.bfloat16),
            biases)


def net_forward(x, params, *, tb=128):
    """x: [B, 784] float32. Returns [B, 10] float32 logits."""
    B, F = x.shape
    assert F == 784
    w1, w2, w3, biases = fold_and_pack_params(params)

    # Batch tile size: multiple of 8 sublanes, no bigger than needed.
    tb = max(8, min(tb, pl.next_power_of_2(max(B, 1))))
    Bp = pl.cdiv(B, tb) * tb
    if Bp != B:
        x = jnp.pad(x, ((0, Bp - B), (0, 0)))
    x = x.astype(jnp.bfloat16)

    grid = (Bp // tb,)
    out = pl.pallas_call(
        net_kernel,
        out_shape=jax.ShapeDtypeStruct((Bp, LANES), jnp.float32),
        grid=grid,
        in_specs=[
            pl.BlockSpec((tb, 784), lambda i: (i, 0)),          # x tile
            pl.BlockSpec((784, LANES), lambda i: (0, 0)),       # w1 (resident)
            pl.BlockSpec((LANES, LANES), lambda i: (0, 0)),     # w2' (resident)
            pl.BlockSpec((LANES, LANES), lambda i: (0, 0)),     # w3' (resident)
            pl.BlockSpec((3, LANES), lambda i: (0, 0)),         # packed biases
        ],
        out_specs=pl.BlockSpec((tb, LANES), lambda i: (i, 0)),
        compiler_params=pltpu.CompilerParams(
            dimension_semantics=("parallel",)),
    )(x, w1, w2, w3, biases)

    return out[:B, :10]


def init_params(key):
    """Deterministic synthetic parameters matching nn.Module shapes."""
    ks = jax.random.split(key, 12)
    p = {}
    # fc1: Linear(784, 128) stored as (in, out); PyTorch stores (out, in).
    p["w1"] = jax.random.normal(ks[0], (784, 128), jnp.float32) * 0.05
    p["b1"] = jax.random.normal(ks[1], (1, 128), jnp.float32) * 0.05
    # BatchNorm1d(128): gamma, beta, running_mean, running_var
    p["g1"] = 1.0 + 0.1 * jax.random.normal(ks[2], (1, 128), jnp.float32)
    p["be1"] = 0.1 * jax.random.normal(ks[3], (1, 128), jnp.float32)
    p["m1"] = 0.1 * jax.random.normal(ks[4], (1, 128), jnp.float32)
    p["v1"] = 0.5 + jax.random.uniform(ks[5], (1, 128), jnp.float32)
    # fc2: Linear(128, 64)
    p["w2"] = jax.random.normal(ks[6], (128, 64), jnp.float32) * 0.05
    p["b2"] = jax.random.normal(ks[7], (1, 64), jnp.float32) * 0.05
    # BatchNorm1d(64)
    p["g2"] = 1.0 + 0.1 * jax.random.normal(ks[8], (1, 64), jnp.float32)
    p["be2"] = 0.1 * jax.random.normal(ks[9], (1, 64), jnp.float32)
    p["m2"] = 0.1 * jax.random.normal(ks[10], (1, 64), jnp.float32)
    p["v2"] = 0.5 + jax.random.uniform(ks[11], (1, 64), jnp.float32)
    # fc3: Linear(64, 10)
    k_w3, k_b3 = jax.random.split(jax.random.fold_in(key, 99))
    p["w3"] = jax.random.normal(k_w3, (64, 10), jnp.float32) * 0.05
    p["b3"] = jax.random.normal(k_b3, (1, 10), jnp.float32) * 0.05
    return p


def net_reference(x, p):
    """Pure-JAX f32 reference for the same eval-mode forward (unfused)."""
    h1 = jnp.maximum(x @ p["w1"] + p["b1"], 0.0)
    h1 = (h1 - p["m1"]) * lax.rsqrt(p["v1"] + EPS) * p["g1"] + p["be1"]
    h2 = jnp.maximum(h1 @ p["w2"] + p["b2"], 0.0)
    h2 = (h2 - p["m2"]) * lax.rsqrt(p["v2"] + EPS) * p["g2"] + p["be2"]
    return h2 @ p["w3"] + p["b3"]


if __name__ == "__main__":
    key = jax.random.PRNGKey(0)
    k_x, k_p = jax.random.split(key)

    B = 256  # 2 batch tiles of 128 -> exercises the tiled/pipelined grid
    x = jax.random.normal(k_x, (B, 784), jnp.float32)
    params = init_params(k_p)

    out = net_forward(x, params, tb=128)
    out = jax.block_until_ready(out)

    ref = net_reference(x, params)
    assert out.shape == (B, 10)
    # Loose tolerance: kernel feeds the MXU with bf16 operands (f32 accumulate).
    assert jnp.allclose(out, ref, atol=5e-2, rtol=5e-2), "mismatch vs reference"

    print("KERNEL_OK")
</pallas_src>

<mosaic_0001>
module attributes {stable_mosaic.version = 11 : i64} {
  func.func @net_kernel(%arg0: i32, %arg1: memref<128x784xbf16, #tpu.memory_space<vmem>>, %arg2: memref<784x128xbf16, #tpu.memory_space<vmem>>, %arg3: memref<128x128xbf16, #tpu.memory_space<vmem>>, %arg4: memref<128x128xbf16, #tpu.memory_space<vmem>>, %arg5: memref<3x128xf32, #tpu.memory_space<vmem>>, %arg6: memref<128x128xf32, #tpu.memory_space<vmem>>) attributes {dimension_semantics = [#tpu.dimension_semantics<parallel>], iteration_bounds = array<i64: 2>, scalar_prefetch = 0 : i64, scratch_operands = 0 : i64, tpu.core_type = #tpu.core_type<tc>, window_params = [{transform_indices = @transform_0, window_bounds = array<i64: 128, 784>}, {pipeline_mode = #tpu.pipeline_mode<synchronous>, transform_indices = @transform_1, window_bounds = array<i64: 784, 128>}, {pipeline_mode = #tpu.pipeline_mode<synchronous>, transform_indices = @transform_2, window_bounds = array<i64: 128, 128>}, {pipeline_mode = #tpu.pipeline_mode<synchronous>, transform_indices = @transform_3, window_bounds = array<i64: 128, 128>}, {pipeline_mode = #tpu.pipeline_mode<synchronous>, transform_indices = @transform_4, window_bounds = array<i64: 3, 128>}, {transform_indices = @transform_5, window_bounds = array<i64: 128, 128>}]} {
    %c0 = arith.constant 0 : index
    %c0_0 = arith.constant 0 : index
    %0 = vector.load %arg1[%c0, %c0_0] : memref<128x784xbf16, #tpu.memory_space<vmem>>, vector<128x784xbf16>
    %c0_1 = arith.constant 0 : index
    %c0_2 = arith.constant 0 : index
    %1 = vector.load %arg5[%c0_1, %c0_2] : memref<3x128xf32, #tpu.memory_space<vmem>>, vector<3x128xf32>
    %c0_3 = arith.constant 0 : index
    %c0_4 = arith.constant 0 : index
    %2 = vector.load %arg2[%c0_3, %c0_4] : memref<784x128xbf16, #tpu.memory_space<vmem>>, vector<784x128xbf16>
    %cst = arith.constant dense<0.000000e+00> : vector<128x128xf32>
    %3 = tpu.matmul %0, %2, %cst {dimension_numbers = #tpu.dot_dimension_numbers<[1], [0], [0], [1], [0, 0, 1, 1], [], []>} : vector<128x784xbf16>, vector<784x128xbf16>, vector<128x128xf32> -> vector<128x128xf32>
    %4 = vector.extract_strided_slice %1 {offsets = [0, 0], sizes = [1, 128], strides = [1, 1]} : vector<3x128xf32> to vector<1x128xf32>
    %5 = vector.broadcast %4 : vector<1x128xf32> to vector<128x128xf32>
    %6 = arith.addf %3, %5 : vector<128x128xf32>
    %cst_5 = arith.constant 0.000000e+00 : f32
    %7 = vector.broadcast %cst_5 : f32 to vector<128x128xf32>
    %8 = arith.maximumf %6, %7 : vector<128x128xf32>
    %9 = arith.truncf %8 : vector<128x128xf32> to vector<128x128xbf16>
    %c0_6 = arith.constant 0 : index
    %c0_7 = arith.constant 0 : index
    %10 = vector.load %arg3[%c0_6, %c0_7] : memref<128x128xbf16, #tpu.memory_space<vmem>>, vector<128x128xbf16>
    %cst_8 = arith.constant dense<0.000000e+00> : vector<128x128xf32>
    %11 = tpu.matmul %9, %10, %cst_8 {dimension_numbers = #tpu.dot_dimension_numbers<[1], [0], [0], [1], [0, 0, 1, 1], [], []>} : vector<128x128xbf16>, vector<128x128xbf16>, vector<128x128xf32> -> vector<128x128xf32>
    %12 = vector.extract_strided_slice %1 {offsets = [1, 0], sizes = [1, 128], strides = [1, 1]} : vector<3x128xf32> to vector<1x128xf32>
    %13 = vector.broadcast %12 : vector<1x128xf32> to vector<128x128xf32>
    %14 = arith.addf %11, %13 : vector<128x128xf32>
    %cst_9 = arith.constant 0.000000e+00 : f32
    %15 = vector.broadcast %cst_9 : f32 to vector<128x128xf32>
    %16 = arith.maximumf %14, %15 : vector<128x128xf32>
    %17 = arith.truncf %16 : vector<128x128xf32> to vector<128x128xbf16>
    %c0_10 = arith.constant 0 : index
    %c0_11 = arith.constant 0 : index
    %18 = vector.load %arg4[%c0_10, %c0_11] : memref<128x128xbf16, #tpu.memory_space<vmem>>, vector<128x128xbf16>
    %cst_12 = arith.constant dense<0.000000e+00> : vector<128x128xf32>
    %19 = tpu.matmul %17, %18, %cst_12 {dimension_numbers = #tpu.dot_dimension_numbers<[1], [0], [0], [1], [0, 0, 1, 1], [], []>} : vector<128x128xbf16>, vector<128x128xbf16>, vector<128x128xf32> -> vector<128x128xf32>
    %20 = vector.extract_strided_slice %1 {offsets = [2, 0], sizes = [1, 128], strides = [1, 1]} : vector<3x128xf32> to vector<1x128xf32>
    %21 = vector.broadcast %20 : vector<1x128xf32> to vector<128x128xf32>
    %22 = arith.addf %19, %21 : vector<128x128xf32>
    %c0_13 = arith.constant 0 : index
    %c0_14 = arith.constant 0 : index
    %23 = vector.load %arg6[%c0_13, %c0_14] : memref<128x128xf32, #tpu.memory_space<vmem>>, vector<128x128xf32>
    tpu.vector_store %arg6[%c0_13, %c0_14], %22 {strides = array<i32>} : memref<128x128xf32, #tpu.memory_space<vmem>>, vector<128x128xf32>,
    return
  }
  func.func @transform_0(%arg0: i32) -> (i32, i32) {
    %c0_i32 = arith.constant 0 : i32
    %c0_i32_0 = arith.constant 0 : i32
    return %arg0, %c0_i32 : i32, i32
  }
  func.func @transform_1(%arg0: i32) -> (i32, i32) {
    %c0_i32 = arith.constant 0 : i32
    %c0_i32_0 = arith.constant 0 : i32
    %c0_i32_1 = arith.constant 0 : i32
    return %c0_i32, %c0_i32_0 : i32, i32
  }
  func.func @transform_2(%arg0: i32) -> (i32, i32) {
    %c0_i32 = arith.constant 0 : i32
    %c0_i32_0 = arith.constant 0 : i32
    %c0_i32_1 = arith.constant 0 : i32
    return %c0_i32, %c0_i32_0 : i32, i32
  }
  func.func @transform_3(%arg0: i32) -> (i32, i32) {
    %c0_i32 = arith.constant 0 : i32
    %c0_i32_0 = arith.constant 0 : i32
    %c0_i32_1 = arith.constant 0 : i32
    return %c0_i32, %c0_i32_0 : i32, i32
  }
  func.func @transform_4(%arg0: i32) -> (i32, i32) {
    %c0_i32 = arith.constant 0 : i32
    %c0_i32_0 = arith.constant 0 : i32
    %c0_i32_1 = arith.constant 0 : i32
    return %c0_i32, %c0_i32_0 : i32, i32
  }
  func.func @transform_5(%arg0: i32) -> (i32, i32) {
    %c0_i32 = arith.constant 0 : i32
    %c0_i32_0 = arith.constant 0 : i32
    return %arg0, %c0_i32 : i32, i32
  }
}

</mosaic_0001>

<llo_original>
// kernel: tpu_custom_call.1
$region0: #{tpu_custom_call.1}
  #allocation0 [shape = 'u32[]', space=smem, size = 0x4, offset = 0x4, fixed_abs, tag = 'smem constant byte address 0x4 - core index']
  #allocation1 [shape = 'u32[144,128]{1,0:T(1,128)}', space=vmem, size = 0x12000, scoped, tag = 'internal scratch']
  %s0 = inlined_call_operand.vmem [shape: bf16[256,784], index: 0, kind: input, shape index: {}]
  %s1 = inlined_call_operand.vmem [shape: bf16[784,128], index: 1, kind: input, shape index: {}]
  %s2 = inlined_call_operand.vmem [shape: bf16[128,128], index: 2, kind: input, shape index: {}]
  %s3 = inlined_call_operand.vmem [shape: bf16[128,128], index: 3, kind: input, shape index: {}]
  %s4 = inlined_call_operand.vmem [shape: f32[3,128], index: 4, kind: input, shape index: {}]
  %s5 = inlined_call_operand.hbm [shape: f32[256,128], index: 5, kind: output, shape index: {}]
  %s6 = sld [smem:[#allocation0]]
  $region53: #{tpu_custom_call.1} parent=0
    _
  %s8 = ssub.s32 1, %s6
  %s9 = scalar_select 0, %s8, %s6
  $region1: #{tpu_custom_call.1} parent=0
    #allocation2 [shape = 'u8[131072]{0}', space=vmem, size = 0x20000, scoped, tag = 'output window, operand 0']
    #allocation3 [shape = 's32[2]{0}', space=sflag, size = 0x8, scoped, tag = 'scoped memory for tpu_custom_call.1']
    %10 = vsyncpa [#allocation3], 0
    %s11 = scalar_lea.sflag [#allocation3], 1
    %12 = vsyncpa %s11, 0
    loop: start=0, step=1, limit=4
    $region2: #{tpu_custom_call.1} parent=1 // loop_pre_header
      _
    $region3: #{tpu_custom_call.1} parent=1 // loop_header
      %s14 = sphi 0, %s18
      %p15 = scmp.ge.s32.totalorder %s14, 4
      %s24 = sphi 0, %s26
      %s27 = sphi 0, %s24
      %s28 = sphi 0, %s27
      %s44 = sphi 0, %s28
      %s48 = sphi 0, %s48
      %s50 = sphi 0, %s48
      %s51 = sphi 0, %s50
      %s65 = sphi 0, %s51
      %s69 = sphi 0, %s69
      %s71 = sphi 0, %s69
      %s72 = sphi 0, %s71
      %s86 = sphi 0, %s72
      %s90 = sphi 0, %s90
      %s92 = sphi 0, %s90
      %s93 = sphi 0, %s92
      %s107 = sphi 0, %s93
      %s111 = sphi 0, %s111
      %s113 = sphi 0, %s111
      %s114 = sphi 0, %s113
      %s128 = sphi 0, %s114
      %s134 = sphi 0, %s136
      %s137 = sphi 0, %s134
      %s138 = sphi 0, %s137
      %s154 = sphi 0, %s138
    $region4: #{tpu_custom_call.1} parent=1 // loop_header_branch
      %17 = sbr.rel (%p15) target = $region8
    $region5: #{tpu_custom_call.1} parent=1 // loop_body
      %s19 = ssub.s32 %s14, 1
      %s20 = ssub.s32 %s14, 2
      %s21 = sadd.s32 %s14, 1
      %s22 = ssub.s32 %s14, %s21
      %p23 = scmp.eq.s32.totalorder %s22, 0
      %s25 = sadd.s32 %s24, 1
      %s26 = scalar_select %p23, %s24, %s25
      %p29 = pneg %p23
      %p30 = scmp.eq.s32.totalorder %s14, 1
      %p31 = por %p29, %p30
      %p32 = scmp.ne.s32.totalorder %s24, %s27
      %p33 = scmp.eq.s32.totalorder %s14, 0
      %p34 = por %p32, %p33
      %p35 = scmp.ne.s32.totalorder %s24, %s27
      %p36 = scmp.eq.s32.totalorder %s19, 1
      %p37 = por %p35, %p36
      %p38 = scmp.ne.s32.totalorder %s27, %s28
      %p39 = scmp.eq.s32.totalorder %s19, 0
      %p40 = por %p38, %p39
      %p41 = scmp.ne.s32.totalorder %s27, %s28
      %p42 = scmp.eq.s32.totalorder %s20, 1
      %p43 = por %p41, %p42
      %p45 = scmp.ne.s32.totalorder %s28, %s44
      %p46 = scmp.eq.s32.totalorder %s20, 0
      %p47 = por %p45, %p46
      %s49 = sadd.s32 %s48, 1
      %p52 = scmp.eq.s32.totalorder %s14, 1
      %p53 = scmp.ne.s32.totalorder %s48, %s50
      %p54 = scmp.eq.s32.totalorder %s14, 0
      %p55 = por %p53, %p54
      %p56 = scmp.ne.s32.totalorder %s48, %s50
      %p57 = scmp.eq.s32.totalorder %s19, 1
      %p58 = por %p56, %p57
      %p59 = scmp.ne.s32.totalorder %s50, %s51
      %p60 = scmp.eq.s32.totalorder %s19, 0
      %p61 = por %p59, %p60
      %p62 = scmp.ne.s32.totalorder %s50, %s51
      %p63 = scmp.eq.s32.totalorder %s20, 1
      %p64 = por %p62, %p63
      %p66 = scmp.ne.s32.totalorder %s51, %s65
      %p67 = scmp.eq.s32.totalorder %s20, 0
      %p68 = por %p66, %p67
      %s70 = sadd.s32 %s69, 1
      %p73 = scmp.eq.s32.totalorder %s14, 1
      %p74 = scmp.ne.s32.totalorder %s69, %s71
      %p75 = scmp.eq.s32.totalorder %s14, 0
      %p76 = por %p74, %p75
      %p77 = scmp.ne.s32.totalorder %s69, %s71
      %p78 = scmp.eq.s32.totalorder %s19, 1
      %p79 = por %p77, %p78
      %p80 = scmp.ne.s32.totalorder %s71, %s72
      %p81 = scmp.eq.s32.totalorder %s19, 0
      %p82 = por %p80, %p81
      %p83 = scmp.ne.s32.totalorder %s71, %s72
      %p84 = scmp.eq.s32.totalorder %s20, 1
      %p85 = por %p83, %p84
      %p87 = scmp.ne.s32.totalorder %s72, %s86
      %p88 = scmp.eq.s32.totalorder %s20, 0
      %p89 = por %p87, %p88
      %s91 = sadd.s32 %s90, 1
      %p94 = scmp.eq.s32.totalorder %s14, 1
      %p95 = scmp.ne.s32.totalorder %s90, %s92
      %p96 = scmp.eq.s32.totalorder %s14, 0
      %p97 = por %p95, %p96
      %p98 = scmp.ne.s32.totalorder %s90, %s92
      %p99 = scmp.eq.s32.totalorder %s19, 1
      %p100 = por %p98, %p99
      %p101 = scmp.ne.s32.totalorder %s92, %s93
      %p102 = scmp.eq.s32.totalorder %s19, 0
      %p103 = por %p101, %p102
      %p104 = scmp.ne.s32.totalorder %s92, %s93
      %p105 = scmp.eq.s32.totalorder %s20, 1
      %p106 = por %p104, %p105
      %p108 = scmp.ne.s32.totalorder %s93, %s107
      %p109 = scmp.eq.s32.totalorder %s20, 0
      %p110 = por %p108, %p109
      %s112 = sadd.s32 %s111, 1
      %p115 = scmp.eq.s32.totalorder %s14, 1
      %p116 = scmp.ne.s32.totalorder %s111, %s113
      %p117 = scmp.eq.s32.totalorder %s14, 0
      %p118 = por %p116, %p117
      %p119 = scmp.ne.s32.totalorder %s111, %s113
      %p120 = scmp.eq.s32.totalorder %s19, 1
      %p121 = por %p119, %p120
      %p122 = scmp.ne.s32.totalorder %s113, %s114
      %p123 = scmp.eq.s32.totalorder %s19, 0
      %p124 = por %p122, %p123
      %p125 = scmp.ne.s32.totalorder %s113, %s114
      %p126 = scmp.eq.s32.totalorder %s20, 1
      %p127 = por %p125, %p126
      %p129 = scmp.ne.s32.totalorder %s114, %s128
      %p130 = scmp.eq.s32.totalorder %s20, 0
      %p131 = por %p129, %p130
      %s132 = ssub.s32 %s14, %s21
      %p133 = scmp.eq.s32.totalorder %s132, 0
      %s135 = sadd.s32 %s134, 1
      %s136 = scalar_select %p133, %s134, %s135
      %p139 = pneg %p133
      %p140 = scmp.eq.s32.totalorder %s14, 1
      %p141 = por %p139, %p140
      %p142 = scmp.ne.s32.totalorder %s134, %s137
      %p143 = scmp.eq.s32.totalorder %s14, 0
      %p144 = por %p142, %p143
      %p145 = scmp.ne.s32.totalorder %s134, %s137
      %p146 = scmp.eq.s32.totalorder %s19, 1
      %p147 = por %p145, %p146
      %p148 = scmp.ne.s32.totalorder %s137, %s138
      %p149 = scmp.eq.s32.totalorder %s19, 0
      %p150 = por %p148, %p149
      %p151 = scmp.ne.s32.totalorder %s137, %s138
      %p152 = scmp.eq.s32.totalorder %s20, 1
      %p153 = por %p151, %p152
      %p155 = scmp.ne.s32.totalorder %s138, %s154
      %p156 = scmp.eq.s32.totalorder %s20, 0
      %p157 = por %p155, %p156
      %p158 = scmp.le.s32.totalorder 1, %s14
      %p159 = scmp.lt.s32.totalorder %s14, 3
      %p160 = pnand %p158, %p159
      %p161 = pneg %p160
      // Predicated region
      $region9: #{tpu_custom_call.1} parent=5 // pred_check
        _
      $region10: #{tpu_custom_call.1} parent=5 // pred_check_branch
        %163 = sbr.rel (%p160) target = $region12
      $region11: #{tpu_custom_call.1} parent=5 // pred_region
        %s164 = ssub.s32 %s14, 1
        // Predicated region
        $region13: #{tpu_custom_call.1} parent=11 // pred_check
          %p165 = pneg %p61
        $region14: #{tpu_custom_call.1} parent=11 // pred_check_branch
          %167 = sbr.rel (%p165) target = $region16
        $region15: #{tpu_custom_call.1} parent=11 // pred_region
          _
        $region16: #{tpu_custom_call.1} parent=11 // pred_fallthru
          _
        // Predicated region
        $region17: #{tpu_custom_call.1} parent=11 // pred_check
          %p168 = pneg %p82
        $region18: #{tpu_custom_call.1} parent=11 // pred_check_branch
          %170 = sbr.rel (%p168) target = $region20
        $region19: #{tpu_custom_call.1} parent=11 // pred_region
          _
        $region20: #{tpu_custom_call.1} parent=11 // pred_fallthru
          _
        // Predicated region
        $region21: #{tpu_custom_call.1} parent=11 // pred_check
          %p171 = pneg %p103
        $region22: #{tpu_custom_call.1} parent=11 // pred_check_branch
          %173 = sbr.rel (%p171) target = $region24
        $region23: #{tpu_custom_call.1} parent=11 // pred_region
          _
        $region24: #{tpu_custom_call.1} parent=11 // pred_fallthru
          _
        // Predicated region
        $region25: #{tpu_custom_call.1} parent=11 // pred_check
          %p174 = pneg %p124
        $region26: #{tpu_custom_call.1} parent=11 // pred_check_branch
          %176 = sbr.rel (%p174) target = $region28
        $region27: #{tpu_custom_call.1} parent=11 // pred_region
          _
        $region28: #{tpu_custom_call.1} parent=11 // pred_fallthru
          _
      $region12: #{tpu_custom_call.1} parent=5 // pred_fallthru
        _
      %p177 = scmp.lt.s32.totalorder %s14, 2
      // Predicated region
      $region29: #{tpu_custom_call.1} parent=5 // pred_check
        %p178 = pneg %p177
      $region30: #{tpu_custom_call.1} parent=5 // pred_check_branch
        %180 = sbr.rel (%p178) target = $region32
      $region31: #{tpu_custom_call.1} parent=5 // pred_region
        // Predicated region
        $region33: #{tpu_custom_call.1} parent=31 // pred_check
          %p181 = pneg %p34
        $region34: #{tpu_custom_call.1} parent=31 // pred_check_branch
          %183 = sbr.rel (%p181) target = $region36
        $region35: #{tpu_custom_call.1} parent=31 // pred_region
          %s184 = smul.u32 16, %s14
          %p185 = scmp.lt.s32.totalorder %s184, 31
          %s186 = scalar_select %p185, %s184, 31
          %s187 = smul.addr %s186, 7
          %s188 = smul.addr %s187, 4
          %s189 = scalar_lea.vmem %s0, %s188
          %s190 = smul.u32 16, %s14
        $region36: #{tpu_custom_call.1} parent=31 // pred_fallthru
          _
      $region32: #{tpu_custom_call.1} parent=5 // pred_fallthru
        _
      %p191 = scmp.le.s32.totalorder 1, %s14
      %p192 = scmp.lt.s32.totalorder %s14, 3
      %p193 = pnand %p191, %p192
      %p194 = pneg %p193
      // Predicated region
      $region37: #{tpu_custom_call.1} parent=5 // pred_check
        _
      $region38: #{tpu_custom_call.1} parent=5 // pred_check_branch
        %196 = sbr.rel (%p193) target = $region40
      $region39: #{tpu_custom_call.1} parent=5 // pred_region
        %s197 = ssub.s32 %s14, 1
        %s198 = smul.u32 16, %s19
        %p199 = scmp.lt.s32.totalorder %s198, 31
        %s200 = scalar_select %p199, %s198, 31
        %s201 = smul.addr %s200, 7
        %s202 = smul.addr %s201, 4
        %s203 = scalar_lea.vmem %s0, %s202
        %p204 = pneg %p40
        %p205 = pneg %p37
        %p206 = pneg %p61
        %p207 = pneg %p58
        %p208 = pneg %p82
        %p209 = pneg %p79
        %p210 = pneg %p103
        %p211 = pneg %p100
        %p212 = pneg %p124
        %p213 = pneg %p121
        %p214 = pneg %p150
        %p215 = pneg %p147
        %s216 = sand.u32 %s137, 1
        %s217 = scalar_lea.sflag [#allocation3], %s216
        %s218 = sand.u32 %s137, 1
        %s219 = smul.addr %s218, 128
        %s220 = scalar_lea.vmem [#allocation2], %s219
        %s221 = smul.u32 16, %s19
        %p222 = scmp.lt.s32.totalorder %s221, 31
        %s223 = scalar_select %p222, %s221, 31
        %s224 = smul.addr %s223, 7
        %s225 = smul.addr %s224, 4
        %s226 = scalar_lea.vmem %s0, %s225
        %s227 = smul.u32 16, %s19
        %s228 = smul.u32 16, %s19
        %v230 = vld [vmem:[%s226] sm:$0xff]
        %v231 = vld [vmem:[%s226 + $0x8] sm:$0xff]
        %v232 = vld [vmem:[%s226 + $0x10] sm:$0xff]
        %v233 = vld [vmem:[%s226 + $0x18] sm:$0xf]
        %v234 = vld [vmem:[%s226 + $0x1c] sm:$0xff]
        %v235 = vld [vmem:[%s226 + $0x24] sm:$0xff]
        %v236 = vld [vmem:[%s226 + $0x2c] sm:$0xff]
        %v237 = vld [vmem:[%s226 + $0x34] sm:$0xf]
        %v238 = vld [vmem:[%s226 + $0x38] sm:$0xff]
        %v239 = vld [vmem:[%s226 + $0x40] sm:$0xff]
        %v240 = vld [vmem:[%s226 + $0x48] sm:$0xff]
        %v241 = vld [vmem:[%s226 + $0x50] sm:$0xf]
        %v242 = vld [vmem:[%s226 + $0x54] sm:$0xff]
        %v243 = vld [vmem:[%s226 + $0x5c] sm:$0xff]
        %v244 = vld [vmem:[%s226 + $0x64] sm:$0xff]
        %v245 = vld [vmem:[%s226 + $0x6c] sm:$0xf]
        %v246 = vld [vmem:[%s226 + $0x70] sm:$0xff]
        %v247 = vld [vmem:[%s226 + $0x78] sm:$0xff]
        %v248 = vld [vmem:[%s226 + $0x80] sm:$0xff]
        %v249 = vld [vmem:[%s226 + $0x88] sm:$0xf]
        %v250 = vld [vmem:[%s226 + $0x8c] sm:$0xff]
        %v251 = vld [vmem:[%s226 + $0x94] sm:$0xff]
        %v252 = vld [vmem:[%s226 + $0x9c] sm:$0xff]
        %v253 = vld [vmem:[%s226 + $0xa4] sm:$0xf]
        %v254 = vld [vmem:[%s226 + $0xa8] sm:$0xff]
        %v255 = vld [vmem:[%s226 + $0xb0] sm:$0xff]
        %v256 = vld [vmem:[%s226 + $0xb8] sm:$0xff]
        %v257 = vld [vmem:[%s226 + $0xc0] sm:$0xf]
        %v258 = vld [vmem:[%s226 + $0xc4] sm:$0xff]
        %v259 = vld [vmem:[%s226 + $0xcc] sm:$0xff]
        %v260 = vld [vmem:[%s226 + $0xd4] sm:$0xff]
        %v261 = vld [vmem:[%s226 + $0xdc] sm:$0xf]
        %v262 = vld [vmem:[%s226 + $0xe0] sm:$0xff]
        %v263 = vld [vmem:[%s226 + $0xe8] sm:$0xff]
        %v264 = vld [vmem:[%s226 + $0xf0] sm:$0xff]
        %v265 = vld [vmem:[%s226 + $0xf8] sm:$0xf]
        %v266 = vld [vmem:[%s226 + $0xfc] sm:$0xff]
        %v267 = vld [vmem:[%s226 + $0x104] sm:$0xff]
        %v268 = vld [vmem:[%s226 + $0x10c] sm:$0xff]
        %v269 = vld [vmem:[%s226 + $0x114] sm:$0xf]
        %v270 = vld [vmem:[%s226 + $0x118] sm:$0xff]
        %v271 = vld [vmem:[%s226 + $0x120] sm:$0xff]
        %v272 = vld [vmem:[%s226 + $0x128] sm:$0xff]
        %v273 = vld [vmem:[%s226 + $0x130] sm:$0xf]
        %v274 = vld [vmem:[%s226 + $0x134] sm:$0xff]
        %v275 = vld [vmem:[%s226 + $0x13c] sm:$0xff]
        %v276 = vld [vmem:[%s226 + $0x144] sm:$0xff]
        %v277 = vld [vmem:[%s226 + $0x14c] sm:$0xf]
        %v278 = vld [vmem:[%s226 + $0x150] sm:$0xff]
        %v279 = vld [vmem:[%s226 + $0x158] sm:$0xff]
        %v280 = vld [vmem:[%s226 + $0x160] sm:$0xff]
        %v281 = vld [vmem:[%s226 + $0x168] sm:$0xf]
        %v282 = vld [vmem:[%s226 + $0x16c] sm:$0xff]
        %v283 = vld [vmem:[%s226 + $0x174] sm:$0xff]
        %v284 = vld [vmem:[%s226 + $0x17c] sm:$0xff]
        %v285 = vld [vmem:[%s226 + $0x184] sm:$0xf]
        %v286 = vld [vmem:[%s226 + $0x188] sm:$0xff]
        %v287 = vld [vmem:[%s226 + $0x190] sm:$0xff]
        %v288 = vld [vmem:[%s226 + $0x198] sm:$0xff]
        %v289 = vld [vmem:[%s226 + $0x1a0] sm:$0xf]
        %v290 = vld [vmem:[%s226 + $0x1a4] sm:$0xff]
        %v291 = vld [vmem:[%s226 + $0x1ac] sm:$0xff]
        %v292 = vld [vmem:[%s226 + $0x1b4] sm:$0xff]
        %v293 = vld [vmem:[%s226 + $0x1bc] sm:$0xf]
        %v294 = vld [vmem:[%s4] sm:$0x7]
        %v295 = vld [vmem:[%s1] sm:$0xf]
        %v296 = vld [vmem:[%s1 + $0x4] sm:$0xf]
        %v297 = vld [vmem:[%s1 + $0x8] sm:$0xf]
        %v298 = vld [vmem:[%s1 + $0xc] sm:$0xf]
        %v299 = vld [vmem:[%s1 + $0x10] sm:$0xf]
        %v300 = vld [vmem:[%s1 + $0x14] sm:$0xf]
        %v301 = vld [vmem:[%s1 + $0x18] sm:$0xf]
        %v302 = vld [vmem:[%s1 + $0x1c] sm:$0xf]
        %v303 = vld [vmem:[%s1 + $0x20] sm:$0xf]
        %v304 = vld [vmem:[%s1 + $0x24] sm:$0xf]
        %v305 = vld [vmem:[%s1 + $0x28] sm:$0xf]
        %v306 = vld [vmem:[%s1 + $0x2c] sm:$0xf]
        %v307 = vld [vmem:[%s1 + $0x30] sm:$0xf]
        %v308 = vld [vmem:[%s1 + $0x34] sm:$0xf]
        %v309 = vld [vmem:[%s1 + $0x38] sm:$0xf]
        %v310 = vld [vmem:[%s1 + $0x3c] sm:$0xf]
        %v311 = vld [vmem:[%s1 + $0x40] sm:$0xf]
        %v312 = vld [vmem:[%s1 + $0x44] sm:$0xf]
        %v313 = vld [vmem:[%s1 + $0x48] sm:$0xf]
        %v314 = vld [vmem:[%s1 + $0x4c] sm:$0xf]
        %v315 = vld [vmem:[%s1 + $0x50] sm:$0xf]
        %v316 = vld [vmem:[%s1 + $0x54] sm:$0xf]
        %v317 = vld [vmem:[%s1 + $0x58] sm:$0xf]
        %v318 = vld [vmem:[%s1 + $0x5c] sm:$0xf]
        %v319 = vld [vmem:[%s1 + $0x60] sm:$0xf]
        %v320 = vld [vmem:[%s1 + $0x64] sm:$0xf]
        %v321 = vld [vmem:[%s1 + $0x68] sm:$0xf]
        %v322 = vld [vmem:[%s1 + $0x6c] sm:$0xf]
        %v323 = vld [vmem:[%s1 + $0x70] sm:$0xf]
        %v324 = vld [vmem:[%s1 + $0x74] sm:$0xf]
        %v325 = vld [vmem:[%s1 + $0x78] sm:$0xf]
        %v326 = vld [vmem:[%s1 + $0x7c] sm:$0xf]
        %v327 = vld [vmem:[%s1 + $0x80] sm:$0xf]
        %v328 = vld [vmem:[%s1 + $0x84] sm:$0xf]
        %v329 = vld [vmem:[%s1 + $0x88] sm:$0xf]
        %v330 = vld [vmem:[%s1 + $0x8c] sm:$0xf]
        %v331 = vld [vmem:[%s1 + $0x90] sm:$0xf]
        %v332 = vld [vmem:[%s1 + $0x94] sm:$0xf]
        %v333 = vld [vmem:[%s1 + $0x98] sm:$0xf]
        %v334 = vld [vmem:[%s1 + $0x9c] sm:$0xf]
        %v335 = vld [vmem:[%s1 + $0xa0] sm:$0xf]
        %v336 = vld [vmem:[%s1 + $0xa4] sm:$0xf]
        %v337 = vld [vmem:[%s1 + $0xa8] sm:$0xf]
        %v338 = vld [vmem:[%s1 + $0xac] sm:$0xf]
        %v339 = vld [vmem:[%s1 + $0xb0] sm:$0xf]
        %v340 = vld [vmem:[%s1 + $0xb4] sm:$0xf]
        %v341 = vld [vmem:[%s1 + $0xb8] sm:$0xf]
        %v342 = vld [vmem:[%s1 + $0xbc] sm:$0xf]
        %v343 = vld [vmem:[%s1 + $0xc0] sm:$0xf]
        %v344 = vld [vmem:[%s1 + $0xc4] sm:$0xf]
        %v345 = vld [vmem:[%s1 + $0xc8] sm:$0xf]
        %v346 = vld [vmem:[%s1 + $0xcc] sm:$0xf]
        %v347 = vld [vmem:[%s1 + $0xd0] sm:$0xf]
        %v348 = vld [vmem:[%s1 + $0xd4] sm:$0xf]
        %v349 = vld [vmem:[%s1 + $0xd8] sm:$0xf]
        %v350 = vld [vmem:[%s1 + $0xdc] sm:$0xf]
        %v351 = vld [vmem:[%s1 + $0xe0] sm:$0xf]
        %v352 = vld [vmem:[%s1 + $0xe4] sm:$0xf]
        %v353 = vld [vmem:[%s1 + $0xe8] sm:$0xf]
        %v354 = vld [vmem:[%s1 + $0xec] sm:$0xf]
        %v355 = vld [vmem:[%s1 + $0xf0] sm:$0xf]
        %v356 = vld [vmem:[%s1 + $0xf4] sm:$0xf]
        %v357 = vld [vmem:[%s1 + $0xf8] sm:$0xf]
        %v358 = vld [vmem:[%s1 + $0xfc] sm:$0xf]
        %v359 = vld [vmem:[%s1 + $0x100] sm:$0xf]
        %v360 = vld [vmem:[%s1 + $0x104] sm:$0xf]
        %v361 = vld [vmem:[%s1 + $0x108] sm:$0xf]
        %v362 = vld [vmem:[%s1 + $0x10c] sm:$0xf]
        %v363 = vld [vmem:[%s1 + $0x110] sm:$0xf]
        %v364 = vld [vmem:[%s1 + $0x114] sm:$0xf]
        %v365 = vld [vmem:[%s1 + $0x118] sm:$0xf]
        %v366 = vld [vmem:[%s1 + $0x11c] sm:$0xf]
        %v367 = vld [vmem:[%s1 + $0x120] sm:$0xf]
        %v368 = vld [vmem:[%s1 + $0x124] sm:$0xf]
        %v369 = vld [vmem:[%s1 + $0x128] sm:$0xf]
        %v370 = vld [vmem:[%s1 + $0x12c] sm:$0xf]
        %v371 = vld [vmem:[%s1 + $0x130] sm:$0xf]
        %v372 = vld [vmem:[%s1 + $0x134] sm:$0xf]
        %v373 = vld [vmem:[%s1 + $0x138] sm:$0xf]
        %v374 = vld [vmem:[%s1 + $0x13c] sm:$0xf]
        %v375 = vld [vmem:[%s1 + $0x140] sm:$0xf]
        %v376 = vld [vmem:[%s1 + $0x144] sm:$0xf]
        %v377 = vld [vmem:[%s1 + $0x148] sm:$0xf]
        %v378 = vld [vmem:[%s1 + $0x14c] sm:$0xf]
        %v379 = vld [vmem:[%s1 + $0x150] sm:$0xf]
        %v380 = vld [vmem:[%s1 + $0x154] sm:$0xf]
        %v381 = vld [vmem:[%s1 + $0x158] sm:$0xf]
        %v382 = vld [vmem:[%s1 + $0x15c] sm:$0xf]
        %v383 = vld [vmem:[%s1 + $0x160] sm:$0xf]
        %v384 = vld [vmem:[%s1 + $0x164] sm:$0xf]
        %v385 = vld [vmem:[%s1 + $0x168] sm:$0xf]
        %v386 = vld [vmem:[%s1 + $0x16c] sm:$0xf]
        %v387 = vld [vmem:[%s1 + $0x170] sm:$0xf]
        %v388 = vld [vmem:[%s1 + $0x174] sm:$0xf]
        %v389 = vld [vmem:[%s1 + $0x178] sm:$0xf]
        %v390 = vld [vmem:[%s1 + $0x17c] sm:$0xf]
        %v391 = vld [vmem:[%s1 + $0x180] sm:$0xf]
        %v392 = vld [vmem:[%s1 + $0x184] sm:$0xf]
        %v393 = vlaneseq
        %v394 = vshrl.u32 %v393, 7
        %v395 = vsub.s32 0, %v394
        %v396 = vrot.slane %v294, %v395
        %v461 = vunpack.c.l.b16 %v230
        %v462 = vunpack.c.h.b16 %v230
        %v463 = vunpack.c.l.b16 %v231
        %v464 = vunpack.c.h.b16 %v231
        %v465 = vunpack.c.l.b16 %v232
        %v466 = vunpack.c.h.b16 %v232
        %v467 = vunpack.c.l.b16 %v233
        %v468 = vunpack.c.l.b16 %v234
        %v469 = vunpack.c.h.b16 %v234
        %v470 = vunpack.c.l.b16 %v235
        %v471 = vunpack.c.h.b16 %v235
        %v472 = vunpack.c.l.b16 %v236
        %v473 = vunpack.c.h.b16 %v236
        %v474 = vunpack.c.l.b16 %v237
        %v475 = vunpack.c.l.b16 %v238
        %v476 = vunpack.c.h.b16 %v238
        %v477 = vunpack.c.l.b16 %v239
        %v478 = vunpack.c.h.b16 %v239
        %v479 = vunpack.c.l.b16 %v240
        %v480 = vunpack.c.h.b16 %v240
        %v481 = vunpack.c.l.b16 %v241
        %v482 = vunpack.c.l.b16 %v242
        %v483 = vunpack.c.h.b16 %v242
        %v484 = vunpack.c.l.b16 %v243
        %v485 = vunpack.c.h.b16 %v243
        %v486 = vunpack.c.l.b16 %v244
        %v487 = vunpack.c.h.b16 %v244
        %v488 = vunpack.c.l.b16 %v245
        %v489 = vunpack.c.l.b16 %v246
        %v490 = vunpack.c.h.b16 %v246
        %v491 = vunpack.c.l.b16 %v247
        %v492 = vunpack.c.h.b16 %v247
        %v493 = vunpack.c.l.b16 %v248
        %v494 = vunpack.c.h.b16 %v248
        %v495 = vunpack.c.l.b16 %v249
        %v496 = vunpack.c.l.b16 %v250
        %v497 = vunpack.c.h.b16 %v250
        %v498 = vunpack.c.l.b16 %v251
        %v499 = vunpack.c.h.b16 %v251
        %v500 = vunpack.c.l.b16 %v252
        %v501 = vunpack.c.h.b16 %v252
        %v502 = vunpack.c.l.b16 %v253
        %v503 = vunpack.c.l.b16 %v254
        %v504 = vunpack.c.h.b16 %v254
        %v505 = vunpack.c.l.b16 %v255
        %v506 = vunpack.c.h.b16 %v255
        %v507 = vunpack.c.l.b16 %v256
        %v508 = vunpack.c.h.b16 %v256
        %v509 = vunpack.c.l.b16 %v257
        %v510 = vunpack.c.l.b16 %v258
        %v511 = vunpack.c.h.b16 %v258
        %v512 = vunpack.c.l.b16 %v259
        %v513 = vunpack.c.h.b16 %v259
        %v514 = vunpack.c.l.b16 %v260
        %v515 = vunpack.c.h.b16 %v260
        %v516 = vunpack.c.l.b16 %v261
        %v517 = vunpack.c.l.b16 %v262
        %v518 = vunpack.c.h.b16 %v262
        %v519 = vunpack.c.l.b16 %v263
        %v520 = vunpack.c.h.b16 %v263
        %v521 = vunpack.c.l.b16 %v264
        %v522 = vunpack.c.h.b16 %v264
        %v523 = vunpack.c.l.b16 %v265
        %v524 = vunpack.c.l.b16 %v266
        %v525 = vunpack.c.h.b16 %v266
        %v526 = vunpack.c.l.b16 %v267
        %v527 = vunpack.c.h.b16 %v267
        %v528 = vunpack.c.l.b16 %v268
        %v529 = vunpack.c.h.b16 %v268
        %v530 = vunpack.c.l.b16 %v269
        %v531 = vunpack.c.l.b16 %v270
        %v532 = vunpack.c.h.b16 %v270
        %v533 = vunpack.c.l.b16 %v271
        %v534 = vunpack.c.h.b16 %v271
        %v535 = vunpack.c.l.b16 %v272
        %v536 = vunpack.c.h.b16 %v272
        %v537 = vunpack.c.l.b16 %v273
        %v538 = vunpack.c.l.b16 %v274
        %v539 = vunpack.c.h.b16 %v274
        %v540 = vunpack.c.l.b16 %v275
        %v541 = vunpack.c.h.b16 %v275
        %v542 = vunpack.c.l.b16 %v276
        %v543 = vunpack.c.h.b16 %v276
        %v544 = vunpack.c.l.b16 %v277
        %v545 = vunpack.c.l.b16 %v278
        %v546 = vunpack.c.h.b16 %v278
        %v547 = vunpack.c.l.b16 %v279
        %v548 = vunpack.c.h.b16 %v279
        %v549 = vunpack.c.l.b16 %v280
        %v550 = vunpack.c.h.b16 %v280
        %v551 = vunpack.c.l.b16 %v281
        %v552 = vunpack.c.l.b16 %v282
        %v553 = vunpack.c.h.b16 %v282
        %v554 = vunpack.c.l.b16 %v283
        %v555 = vunpack.c.h.b16 %v283
        %v556 = vunpack.c.l.b16 %v284
        %v557 = vunpack.c.h.b16 %v284
        %v558 = vunpack.c.l.b16 %v285
        %v559 = vunpack.c.l.b16 %v286
        %v560 = vunpack.c.h.b16 %v286
        %v561 = vunpack.c.l.b16 %v287
        %v562 = vunpack.c.h.b16 %v287
        %v563 = vunpack.c.l.b16 %v288
        %v564 = vunpack.c.h.b16 %v288
        %v565 = vunpack.c.l.b16 %v289
        %v566 = vunpack.c.l.b16 %v290
        %v567 = vunpack.c.h.b16 %v290
        %v568 = vunpack.c.l.b16 %v291
        %v569 = vunpack.c.h.b16 %v291
        %v570 = vunpack.c.l.b16 %v292
        %v571 = vunpack.c.h.b16 %v292
        %v572 = vunpack.c.l.b16 %v293
        %v573 = vpack.c.b16 %v468, %v461
        %v574 = vpack.c.b16 %v469, %v462
        %v575 = vpack.c.b16 %v470, %v463
        %v576 = vpack.c.b16 %v471, %v464
        %v577 = vpack.c.b16 %v472, %v465
        %v578 = vpack.c.b16 %v473, %v466
        %v579 = vpack.c.b16 %v474, %v467
        %v580 = vpack.c.b16 %v482, %v475
        %v581 = vpack.c.b16 %v483, %v476
        %v582 = vpack.c.b16 %v484, %v477
        %v583 = vpack.c.b16 %v485, %v478
        %v584 = vpack.c.b16 %v486, %v479
        %v585 = vpack.c.b16 %v487, %v480
        %v586 = vpack.c.b16 %v488, %v481
        %v587 = vpack.c.b16 %v496, %v489
        %v588 = vpack.c.b16 %v497, %v490
        %v589 = vpack.c.b16 %v498, %v491
        %v590 = vpack.c.b16 %v499, %v492
        %v591 = vpack.c.b16 %v500, %v493
        %v592 = vpack.c.b16 %v501, %v494
        %v593 = vpack.c.b16 %v502, %v495
        %v594 = vpack.c.b16 %v510, %v503
        %v595 = vpack.c.b16 %v511, %v504
        %v596 = vpack.c.b16 %v512, %v505
        %v597 = vpack.c.b16 %v513, %v506
        %v598 = vpack.c.b16 %v514, %v507
        %v599 = vpack.c.b16 %v515, %v508
        %v600 = vpack.c.b16 %v516, %v509
        %v601 = vpack.c.b16 %v524, %v517
        %v602 = vpack.c.b16 %v525, %v518
        %v603 = vpack.c.b16 %v526, %v519
        %v604 = vpack.c.b16 %v527, %v520
        %v605 = vpack.c.b16 %v528, %v521
        %v606 = vpack.c.b16 %v529, %v522
        %v607 = vpack.c.b16 %v530, %v523
        %v608 = vpack.c.b16 %v538, %v531
        %v609 = vpack.c.b16 %v539, %v532
        %v610 = vpack.c.b16 %v540, %v533
        %v611 = vpack.c.b16 %v541, %v534
        %v612 = vpack.c.b16 %v542, %v535
        %v613 = vpack.c.b16 %v543, %v536
        %v614 = vpack.c.b16 %v544, %v537
        %v615 = vpack.c.b16 %v552, %v545
        %v616 = vpack.c.b16 %v553, %v546
        %v617 = vpack.c.b16 %v554, %v547
        %v618 = vpack.c.b16 %v555, %v548
        %v619 = vpack.c.b16 %v556, %v549
        %v620 = vpack.c.b16 %v557, %v550
        %v621 = vpack.c.b16 %v558, %v551
        %v622 = vpack.c.b16 %v566, %v559
        %v623 = vpack.c.b16 %v567, %v560
        %v624 = vpack.c.b16 %v568, %v561
        %v625 = vpack.c.b16 %v569, %v562
        %v626 = vpack.c.b16 %v570, %v563
        %v627 = vpack.c.b16 %v571, %v564
        %v628 = vpack.c.b16 %v572, %v565
        %v775 = vunpack.c.l.b16 %v295
        %v776 = vunpack.c.l.b16 %v296
        %v777 = vunpack.c.l.b16 %v297
        %v778 = vunpack.c.l.b16 %v298
        %v779 = vunpack.c.l.b16 %v299
        %v780 = vunpack.c.l.b16 %v300
        %v781 = vunpack.c.l.b16 %v301
        %v782 = vunpack.c.l.b16 %v302
        %v783 = vunpack.c.l.b16 %v303
        %v784 = vunpack.c.l.b16 %v304
        %v785 = vunpack.c.l.b16 %v305
        %v786 = vunpack.c.l.b16 %v306
        %v787 = vunpack.c.l.b16 %v307
        %v788 = vunpack.c.l.b16 %v308
        %v789 = vunpack.c.l.b16 %v309
        %v790 = vunpack.c.l.b16 %v310
        %v791 = vunpack.c.l.b16 %v311
        %v792 = vunpack.c.l.b16 %v312
        %v793 = vunpack.c.l.b16 %v313
        %v794 = vunpack.c.l.b16 %v314
        %v795 = vunpack.c.l.b16 %v315
        %v796 = vunpack.c.l.b16 %v316
        %v797 = vunpack.c.l.b16 %v317
        %v798 = vunpack.c.l.b16 %v318
        %v799 = vunpack.c.l.b16 %v319
        %v800 = vunpack.c.l.b16 %v320
        %v801 = vunpack.c.l.b16 %v321
        %v802 = vunpack.c.l.b16 %v322
        %v803 = vunpack.c.l.b16 %v323
        %v804 = vunpack.c.l.b16 %v324
        %v805 = vunpack.c.l.b16 %v325
        %v806 = vunpack.c.l.b16 %v326
        %v807 = vunpack.c.l.b16 %v327
        %v808 = vunpack.c.l.b16 %v328
        %v809 = vunpack.c.l.b16 %v329
        %v810 = vunpack.c.l.b16 %v330
        %v811 = vunpack.c.l.b16 %v331
        %v812 = vunpack.c.l.b16 %v332
        %v813 = vunpack.c.l.b16 %v333
        %v814 = vunpack.c.l.b16 %v334
        %v815 = vunpack.c.l.b16 %v335
        %v816 = vunpack.c.l.b16 %v336
        %v817 = vunpack.c.l.b16 %v337
        %v818 = vunpack.c.l.b16 %v338
        %v819 = vunpack.c.l.b16 %v339
        %v820 = vunpack.c.l.b16 %v340
        %v821 = vunpack.c.l.b16 %v341
        %v822 = vunpack.c.l.b16 %v342
        %v823 = vunpack.c.l.b16 %v343
        %v824 = vunpack.c.l.b16 %v344
        %v825 = vunpack.c.l.b16 %v345
        %v826 = vunpack.c.l.b16 %v346
        %v827 = vunpack.c.l.b16 %v347
        %v828 = vunpack.c.l.b16 %v348
        %v829 = vunpack.c.l.b16 %v349
        %v830 = vunpack.c.l.b16 %v350
        %v831 = vunpack.c.l.b16 %v351
        %v832 = vunpack.c.l.b16 %v352
        %v833 = vunpack.c.l.b16 %v353
        %v834 = vunpack.c.l.b16 %v354
        %v835 = vunpack.c.l.b16 %v355
        %v836 = vunpack.c.l.b16 %v356
        %v837 = vunpack.c.l.b16 %v357
        %v838 = vunpack.c.l.b16 %v358
        %v839 = vunpack.c.l.b16 %v359
        %v840 = vunpack.c.l.b16 %v360
        %v841 = vunpack.c.l.b16 %v361
        %v842 = vunpack.c.l.b16 %v362
        %v843 = vunpack.c.l.b16 %v363
        %v844 = vunpack.c.l.b16 %v364
        %v845 = vunpack.c.l.b16 %v365
        %v846 = vunpack.c.l.b16 %v366
        %v847 = vunpack.c.l.b16 %v367
        %v848 = vunpack.c.l.b16 %v368
        %v849 = vunpack.c.l.b16 %v369
        %v850 = vunpack.c.l.b16 %v370
        %v851 = vunpack.c.l.b16 %v371
        %v852 = vunpack.c.l.b16 %v372
        %v853 = vunpack.c.l.b16 %v373
        %v854 = vunpack.c.l.b16 %v374
        %v855 = vunpack.c.l.b16 %v375
        %v856 = vunpack.c.l.b16 %v376
        %v857 = vunpack.c.l.b16 %v377
        %v858 = vunpack.c.l.b16 %v378
        %v859 = vunpack.c.l.b16 %v379
        %v860 = vunpack.c.l.b16 %v380
        %v861 = vunpack.c.l.b16 %v381
        %v862 = vunpack.c.l.b16 %v382
        %v863 = vunpack.c.l.b16 %v383
        %v864 = vunpack.c.l.b16 %v384
        %v865 = vunpack.c.l.b16 %v385
        %v866 = vunpack.c.l.b16 %v386
        %v867 = vunpack.c.l.b16 %v387
        %v868 = vunpack.c.l.b16 %v388
        %v869 = vunpack.c.l.b16 %v389
        %v870 = vunpack.c.l.b16 %v390
        %v871 = vunpack.c.l.b16 %v391
        %v872 = vunpack.c.l.b16 %v392
        %v873 = vpack.c.b16 %v776, %v775
        %v874 = vpack.c.b16 %v778, %v777
        %v875 = vpack.c.b16 %v780, %v779
        %v876 = vpack.c.b16 %v782, %v781
        %v877 = vpack.c.b16 %v784, %v783
        %v878 = vpack.c.b16 %v786, %v785
        %v879 = vpack.c.b16 %v788, %v787
        %v880 = vpack.c.b16 %v790, %v789
        %v881 = vpack.c.b16 %v792, %v791
        %v882 = vpack.c.b16 %v794, %v793
        %v883 = vpack.c.b16 %v796, %v795
        %v884 = vpack.c.b16 %v798, %v797
        %v885 = vpack.c.b16 %v800, %v799
        %v886 = vpack.c.b16 %v802, %v801
        %v887 = vpack.c.b16 %v804, %v803
        %v888 = vpack.c.b16 %v806, %v805
        %v889 = vpack.c.b16 %v808, %v807
        %v890 = vpack.c.b16 %v810, %v809
        %v891 = vpack.c.b16 %v812, %v811
        %v892 = vpack.c.b16 %v814, %v813
        %v893 = vpack.c.b16 %v816, %v815
        %v894 = vpack.c.b16 %v818, %v817
        %v895 = vpack.c.b16 %v820, %v819
        %v896 = vpack.c.b16 %v822, %v821
        %v897 = vpack.c.b16 %v824, %v823
        %v898 = vpack.c.b16 %v826, %v825
        %v899 = vpack.c.b16 %v828, %v827
        %v900 = vpack.c.b16 %v830, %v829
        %v901 = vpack.c.b16 %v832, %v831
        %v902 = vpack.c.b16 %v834, %v833
        %v903 = vpack.c.b16 %v836, %v835
        %v904 = vpack.c.b16 %v838, %v837
        %v905 = vpack.c.b16 %v840, %v839
        %v906 = vpack.c.b16 %v842, %v841
        %v907 = vpack.c.b16 %v844, %v843
        %v908 = vpack.c.b16 %v846, %v845
        %v909 = vpack.c.b16 %v848, %v847
        %v910 = vpack.c.b16 %v850, %v849
        %v911 = vpack.c.b16 %v852, %v851
        %v912 = vpack.c.b16 %v854, %v853
        %v913 = vpack.c.b16 %v856, %v855
        %v914 = vpack.c.b16 %v858, %v857
        %v915 = vpack.c.b16 %v860, %v859
        %v916 = vpack.c.b16 %v862, %v861
        %v917 = vpack.c.b16 %v864, %v863
        %v918 = vpack.c.b16 %v866, %v865
        %v919 = vpack.c.b16 %v868, %v867
        %v920 = vpack.c.b16 %v870, %v869
        %v921 = vpack.c.b16 %v872, %v871
        %vm971 = vcmask 130048
        %v973 = vsel %vm971, %v579, 0
        %v976 = vsel %vm971, %v586, 0
        %v979 = vsel %vm971, %v593, 0
        %v982 = vsel %vm971, %v600, 0
        %v985 = vsel %vm971, %v607, 0
        %v988 = vsel %vm971, %v614, 0
        %v991 = vsel %vm971, %v621, 0
        %v994 = vsel %vm971, %v628, 0
        %996 = vmatprep.subr.bf16.mxu0 0
        %997 = vmatpush1.bf16.msra.mxu0 %v873
        %998 = vmatprep.subr.bf16.mxu0 0
        %999 = vmatpush1.bf16.msra.mxu0 %v874
        %1000 = vmatprep.subr.bf16.mxu0 0
        %1001 = vmatpush1.bf16.msra.mxu0 %v875
        %1002 = vmatprep.subr.bf16.mxu0 0
        %1003 = vmatpush1.bf16.msra.mxu0 %v876
        %1004 = vmatprep.subr.bf16.mxu0 0
        %1005 = vmatpush1.bf16.msra.mxu0 %v877
        %1006 = vmatprep.subr.bf16.mxu0 0
        %1007 = vmatpush1.bf16.msra.mxu0 %v878
        %1008 = vmatprep.subr.bf16.mxu0 0
        %1009 = vmatpush1.bf16.msra.mxu0 %v879
        %1010 = vmatprep.subr.bf16.mxu0 0
        %1011 = vmatpush1.bf16.msra.mxu0 %v880
        %1012 = vmatprep.subr.bf16.mxu0 0
        %1013 = vmatpush1.bf16.msra.mxu0 %v881
        %1014 = vmatprep.subr.bf16.mxu0 0
        %1015 = vmatpush1.bf16.msra.mxu0 %v882
        %1016 = vmatprep.subr.bf16.mxu0 0
        %1017 = vmatpush1.bf16.msra.mxu0 %v883
        %1018 = vmatprep.subr.bf16.mxu0 0
        %1019 = vmatpush1.bf16.msra.mxu0 %v884
        %1020 = vmatprep.subr.bf16.mxu0 0
        %1021 = vmatpush1.bf16.msra.mxu0 %v885
        %1022 = vmatprep.subr.bf16.mxu0 0
        %1023 = vmatpush1.bf16.msra.mxu0 %v886
        %1024 = vmatprep.subr.bf16.mxu0 0
        %1025 = vmatpush1.bf16.msra.mxu0 %v887
        %1026 = vmatprep.subr.bf16.mxu0 0
        %1027 = vmatpush1.bf16.msra.mxu0 %v888
        %1028 = vmatprep.mubr.bf16.mxu0 %v574
        %1029 = vmatmul.mubr.bf16.gmra.mrb[0].mxu0 %v573
        %v1030 = vpop.f32.mrb[0].mxu0
        %v1031 = vadd.f32 %v396, %v1030
        %v1032 = vpop.f32.mrb[0].mxu0
        %v1033 = vpop.f32.mrb[0].mxu0
        %v1034 = vadd.f32 %v396, %v1033
        %v1035 = vpop.f32.mrb[0].mxu0
        %1036 = vmatprep.mubr.bf16.mxu0 %v581
        %1037 = vmatmul.mubr.bf16.gmra.mrb[0].mxu0 %v580
        %v1038 = vpop.f32.mrb[0].mxu0
        %v1039 = vadd.f32 %v396, %v1038
        %v1040 = vpop.f32.mrb[0].mxu0
        %v1041 = vpop.f32.mrb[0].mxu0
        %v1042 = vadd.f32 %v396, %v1041
        %v1043 = vpop.f32.mrb[0].mxu0
        %1044 = vmatprep.mubr.bf16.mxu0 %v588
        %1045 = vmatmul.mubr.bf16.gmra.mrb[0].mxu0 %v587
        %v1046 = vpop.f32.mrb[0].mxu0
        %v1047 = vadd.f32 %v396, %v1046
        %v1048 = vpop.f32.mrb[0].mxu0
        %v1049 = vpop.f32.mrb[0].mxu0
        %v1050 = vadd.f32 %v396, %v1049
        %v1051 = vpop.f32.mrb[0].mxu0
        %1052 = vmatprep.mubr.bf16.mxu0 %v595
        %1053 = vmatmul.mubr.bf16.gmra.mrb[0].mxu0 %v594
        %v1054 = vpop.f32.mrb[0].mxu0
        %v1055 = vadd.f32 %v396, %v1054
        %v1056 = vpop.f32.mrb[0].mxu0
        %v1057 = vpop.f32.mrb[0].mxu0
        %v1058 = vadd.f32 %v396, %v1057
        %v1059 = vpop.f32.mrb[0].mxu0
        %1060 = vmatprep.mubr.bf16.mxu0 %v602
        %1061 = vmatmul.mubr.bf16.gmra.mrb[0].mxu0 %v601
        %v1062 = vpop.f32.mrb[0].mxu0
        %v1063 = vadd.f32 %v396, %v1062
        %v1064 = vpop.f32.mrb[0].mxu0
        %v1065 = vpop.f32.mrb[0].mxu0
        %v1066 = vadd.f32 %v396, %v1065
        %v1067 = vpop.f32.mrb[0].mxu0
        %1068 = vmatprep.mubr.bf16.mxu0 %v609
        %1069 = vmatmul.mubr.bf16.gmra.mrb[0].mxu0 %v608
        %v1070 = vpop.f32.mrb[0].mxu0
        %v1071 = vadd.f32 %v396, %v1070
        %v1072 = vpop.f32.mrb[0].mxu0
        %v1073 = vpop.f32.mrb[0].mxu0
        %v1074 = vadd.f32 %v396, %v1073
        %v1075 = vpop.f32.mrb[0].mxu0
        %1076 = vmatprep.mubr.bf16.mxu0 %v616
        %1077 = vmatmul.mubr.bf16.gmra.mrb[0].mxu0 %v615
        %v1078 = vpop.f32.mrb[0].mxu0
        %v1079 = vadd.f32 %v396, %v1078
        %v1080 = vpop.f32.mrb[0].mxu0
        %v1081 = vpop.f32.mrb[0].mxu0
        %v1082 = vadd.f32 %v396, %v1081
        %v1083 = vpop.f32.mrb[0].mxu0
        %1084 = vmatprep.mubr.bf16.mxu0 %v623
        %1085 = vmatmul.mubr.bf16.gmra.mrb[0].mxu0 %v622
        %v1086 = vpop.f32.mrb[0].mxu0
        %v1087 = vadd.f32 %v396, %v1086
        %v1088 = vpop.f32.mrb[0].mxu0
        %v1089 = vpop.f32.mrb[0].mxu0
        %v1090 = vadd.f32 %v396, %v1089
        %v1091 = vpop.f32.mrb[0].mxu0
        %1092 = vdwg.mxu0
        %1093 = vmatprep.subr.bf16.mxu0 0
        %1094 = vmatpush1.bf16.msra.mxu0 %v889
        %1095 = vmatprep.subr.bf16.mxu0 0
        %1096 = vmatpush1.bf16.msra.mxu0 %v890
        %1097 = vmatprep.subr.bf16.mxu0 0
        %1098 = vmatpush1.bf16.msra.mxu0 %v891
        %1099 = vmatprep.subr.bf16.mxu0 0
        %1100 = vmatpush1.bf16.msra.mxu0 %v892
        %1101 = vmatprep.subr.bf16.mxu0 0
        %1102 = vmatpush1.bf16.msra.mxu0 %v893
        %1103 = vmatprep.subr.bf16.mxu0 0
        %1104 = vmatpush1.bf16.msra.mxu0 %v894
        %1105 = vmatprep.subr.bf16.mxu0 0
        %1106 = vmatpush1.bf16.msra.mxu0 %v895
        %1107 = vmatprep.subr.bf16.mxu0 0
        %1108 = vmatpush1.bf16.msra.mxu0 %v896
        %1109 = vmatprep.subr.bf16.mxu0 0
        %1110 = vmatpush1.bf16.msra.mxu0 %v897
        %1111 = vmatprep.subr.bf16.mxu0 0
        %1112 = vmatpush1.bf16.msra.mxu0 %v898
        %1113 = vmatprep.subr.bf16.mxu0 0
        %1114 = vmatpush1.bf16.msra.mxu0 %v899
        %1115 = vmatprep.subr.bf16.mxu0 0
        %1116 = vmatpush1.bf16.msra.mxu0 %v900
        %1117 = vmatprep.subr.bf16.mxu0 0
        %1118 = vmatpush1.bf16.msra.mxu0 %v901
        %1119 = vmatprep.subr.bf16.mxu0 0
        %1120 = vmatpush1.bf16.msra.mxu0 %v902
        %1121 = vmatprep.subr.bf16.mxu0 0
        %1122 = vmatpush1.bf16.msra.mxu0 %v903
        %1123 = vmatprep.subr.bf16.mxu0 0
        %1124 = vmatpush1.bf16.msra.mxu0 %v904
        %1125 = vmatprep.mubr.bf16.mxu0 %v576
        %1126 = vmatmul.mubr.bf16.gmra.mrb[0].mxu0 %v575
        %v1127 = vpop.f32.mrb[0].mxu0
        %v1128 = vadd.f32 %v1031, %v1127
        %v1129 = vpop.f32.mrb[0].mxu0
        %v1130 = vpop.f32.mrb[0].mxu0
        %v1131 = vadd.f32 %v1034, %v1130
        %v1132 = vpop.f32.mrb[0].mxu0
        %1133 = vmatprep.mubr.bf16.mxu0 %v583
        %1134 = vmatmul.mubr.bf16.gmra.mrb[0].mxu0 %v582
        %v1135 = vpop.f32.mrb[0].mxu0
        %v1136 = vadd.f32 %v1039, %v1135
        %v1137 = vpop.f32.mrb[0].mxu0
        %v1138 = vpop.f32.mrb[0].mxu0
        %v1139 = vadd.f32 %v1042, %v1138
        %v1140 = vpop.f32.mrb[0].mxu0
        %1141 = vmatprep.mubr.bf16.mxu0 %v590
        %1142 = vmatmul.mubr.bf16.gmra.mrb[0].mxu0 %v589
        %v1143 = vpop.f32.mrb[0].mxu0
        %v1144 = vadd.f32 %v1047, %v1143
        %v1145 = vpop.f32.mrb[0].mxu0
        %v1146 = vpop.f32.mrb[0].mxu0
        %v1147 = vadd.f32 %v1050, %v1146
        %v1148 = vpop.f32.mrb[0].mxu0
        %1149 = vmatprep.mubr.bf16.mxu0 %v597
        %1150 = vmatmul.mubr.bf16.gmra.mrb[0].mxu0 %v596
        %v1151 = vpop.f32.mrb[0].mxu0
        %v1152 = vadd.f32 %v1055, %v1151
        %v1153 = vpop.f32.mrb[0].mxu0
        %v1154 = vpop.f32.mrb[0].mxu0
        %v1155 = vadd.f32 %v1058, %v1154
        %v1156 = vpop.f32.mrb[0].mxu0
        %1157 = vmatprep.mubr.bf16.mxu0 %v604
        %1158 = vmatmul.mubr.bf16.gmra.mrb[0].mxu0 %v603
        %v1159 = vpop.f32.mrb[0].mxu0
        %v1160 = vadd.f32 %v1063, %v1159
        %v1161 = vpop.f32.mrb[0].mxu0
        %v1162 = vpop.f32.mrb[0].mxu0
        %v1163 = vadd.f32 %v1066, %v1162
        %v1164 = vpop.f32.mrb[0].mxu0
        %1165 = vmatprep.mubr.bf16.mxu0 %v611
        %1166 = vmatmul.mubr.bf16.gmra.mrb[0].mxu0 %v610
        %v1167 = vpop.f32.mrb[0].mxu0
        %v1168 = vadd.f32 %v1071, %v1167
        %v1169 = vpop.f32.mrb[0].mxu0
        %v1170 = vpop.f32.mrb[0].mxu0
        %v1171 = vadd.f32 %v1074, %v1170
        %v1172 = vpop.f32.mrb[0].mxu0
        %1173 = vmatprep.mubr.bf16.mxu0 %v618
        %1174 = vmatmul.mubr.bf16.gmra.mrb[0].mxu0 %v617
        %v1175 = vpop.f32.mrb[0].mxu0
        %v1176 = vadd.f32 %v1079, %v1175
        %v1177 = vpop.f32.mrb[0].mxu0
        %v1178 = vpop.f32.mrb[0].mxu0
        %v1179 = vadd.f32 %v1082, %v1178
        %v1180 = vpop.f32.mrb[0].mxu0
        %1181 = vmatprep.mubr.bf16.mxu0 %v625
        %1182 = vmatmul.mubr.bf16.gmra.mrb[0].mxu0 %v624
        %v1183 = vpop.f32.mrb[0].mxu0
        %v1184 = vadd.f32 %v1087, %v1183
        %v1185 = vpop.f32.mrb[0].mxu0
        %v1186 = vpop.f32.mrb[0].mxu0
        %v1187 = vadd.f32 %v1090, %v1186
        %v1188 = vpop.f32.mrb[0].mxu0
        %1189 = vdwg.mxu0
        %1190 = vmatprep.subr.bf16.mxu0 0
        %1191 = vmatpush1.bf16.msra.mxu0 %v905
        %1192 = vmatprep.subr.bf16.mxu0 0
        %1193 = vmatpush1.bf16.msra.mxu0 %v906
        %1194 = vmatprep.subr.bf16.mxu0 0
        %1195 = vmatpush1.bf16.msra.mxu0 %v907
        %1196 = vmatprep.subr.bf16.mxu0 0
        %1197 = vmatpush1.bf16.msra.mxu0 %v908
        %1198 = vmatprep.subr.bf16.mxu0 0
        %1199 = vmatpush1.bf16.msra.mxu0 %v909
        %1200 = vmatprep.subr.bf16.mxu0 0
        %1201 = vmatpush1.bf16.msra.mxu0 %v910
        %1202 = vmatprep.subr.bf16.mxu0 0
        %1203 = vmatpush1.bf16.msra.mxu0 %v911
        %1204 = vmatprep.subr.bf16.mxu0 0
        %1205 = vmatpush1.bf16.msra.mxu0 %v912
        %1206 = vmatprep.subr.bf16.mxu0 0
        %1207 = vmatpush1.bf16.msra.mxu0 %v913
        %1208 = vmatprep.subr.bf16.mxu0 0
        %1209 = vmatpush1.bf16.msra.mxu0 %v914
        %1210 = vmatprep.subr.bf16.mxu0 0
        %1211 = vmatpush1.bf16.msra.mxu0 %v915
        %1212 = vmatprep.subr.bf16.mxu0 0
        %1213 = vmatpush1.bf16.msra.mxu0 %v916
        %1214 = vmatprep.subr.bf16.mxu0 0
        %1215 = vmatpush1.bf16.msra.mxu0 %v917
        %1216 = vmatprep.subr.bf16.mxu0 0
        %1217 = vmatpush1.bf16.msra.mxu0 %v918
        %1218 = vmatprep.subr.bf16.mxu0 0
        %1219 = vmatpush1.bf16.msra.mxu0 %v919
        %1220 = vmatprep.subr.bf16.mxu0 0
        %1221 = vmatpush1.bf16.msra.mxu0 %v920
        %1222 = vmatprep.mubr.bf16.mxu0 %v578
        %1223 = vmatmul.mubr.bf16.gmra.mrb[0].mxu0 %v577
        %v1224 = vpop.f32.mrb[0].mxu0
        %v1225 = vadd.f32 %v1128, %v1224
        %v1226 = vpop.f32.mrb[0].mxu0
        %v1227 = vpop.f32.mrb[0].mxu0
        %v1228 = vadd.f32 %v1131, %v1227
        %v1229 = vpop.f32.mrb[0].mxu0
        %1230 = vmatprep.mubr.bf16.mxu0 %v585
        %1231 = vmatmul.mubr.bf16.gmra.mrb[0].mxu0 %v584
        %v1232 = vpop.f32.mrb[0].mxu0
        %v1233 = vadd.f32 %v1136, %v1232
        %v1234 = vpop.f32.mrb[0].mxu0
        %v1235 = vpop.f32.mrb[0].mxu0
        %v1236 = vadd.f32 %v1139, %v1235
        %v1237 = vpop.f32.mrb[0].mxu0
        %1238 = vmatprep.mubr.bf16.mxu0 %v592
        %1239 = vmatmul.mubr.bf16.gmra.mrb[0].mxu0 %v591
        %v1240 = vpop.f32.mrb[0].mxu0
        %v1241 = vadd.f32 %v1144, %v1240
        %v1242 = vpop.f32.mrb[0].mxu0
        %v1243 = vpop.f32.mrb[0].mxu0
        %v1244 = vadd.f32 %v1147, %v1243
        %v1245 = vpop.f32.mrb[0].mxu0
        %1246 = vmatprep.mubr.bf16.mxu0 %v599
        %1247 = vmatmul.mubr.bf16.gmra.mrb[0].mxu0 %v598
        %v1248 = vpop.f32.mrb[0].mxu0
        %v1249 = vadd.f32 %v1152, %v1248
        %v1250 = vpop.f32.mrb[0].mxu0
        %v1251 = vpop.f32.mrb[0].mxu0
        %v1252 = vadd.f32 %v1155, %v1251
        %v1253 = vpop.f32.mrb[0].mxu0
        %1254 = vmatprep.mubr.bf16.mxu0 %v606
        %1255 = vmatmul.mubr.bf16.gmra.mrb[0].mxu0 %v605
        %v1256 = vpop.f32.mrb[0].mxu0
        %v1257 = vadd.f32 %v1160, %v1256
        %v1258 = vpop.f32.mrb[0].mxu0
        %v1259 = vpop.f32.mrb[0].mxu0
        %v1260 = vadd.f32 %v1163, %v1259
        %v1261 = vpop.f32.mrb[0].mxu0
        %1262 = vmatprep.mubr.bf16.mxu0 %v613
        %1263 = vmatmul.mubr.bf16.gmra.mrb[0].mxu0 %v612
        %v1264 = vpop.f32.mrb[0].mxu0
        %v1265 = vadd.f32 %v1168, %v1264
        %v1266 = vpop.f32.mrb[0].mxu0
        %v1267 = vpop.f32.mrb[0].mxu0
        %v1268 = vadd.f32 %v1171, %v1267
        %v1269 = vpop.f32.mrb[0].mxu0
        %1270 = vmatprep.mubr.bf16.mxu0 %v620
        %1271 = vmatmul.mubr.bf16.gmra.mrb[0].mxu0 %v619
        %v1272 = vpop.f32.mrb[0].mxu0
        %v1273 = vadd.f32 %v1176, %v1272
        %v1274 = vpop.f32.mrb[0].mxu0
        %v1275 = vpop.f32.mrb[0].mxu0
        %v1276 = vadd.f32 %v1179, %v1275
        %v1277 = vpop.f32.mrb[0].mxu0
        %1278 = vmatprep.mubr.bf16.mxu0 %v627
        %1279 = vmatmul.mubr.bf16.gmra.mrb[0].mxu0 %v626
        %v1280 = vpop.f32.mrb[0].mxu0
        %v1281 = vadd.f32 %v1184, %v1280
        %v1282 = vpop.f32.mrb[0].mxu0
        %v1283 = vpop.f32.mrb[0].mxu0
        %v1284 = vadd.f32 %v1187, %v1283
        %v1285 = vpop.f32.mrb[0].mxu0
        %1286 = vdwg.mxu0
        %1287 = vmatprep.subr.bf16.mxu0 0
        %1288 = vmatpush1.bf16.msra.mxu0 %v921
        %1289 = vmatprep.subr.bf16.mxu0 0
        %1290 = vmatpush1.bf16.msra.mxu0 0
        %1291 = vmatprep.subr.bf16.mxu0 0
        %1292 = vmatpush1.bf16.msra.mxu0 0
        %1293 = vmatprep.subr.bf16.mxu0 0
        %1294 = vmatpush1.bf16.msra.mxu0 0
        %1295 = vmatprep.subr.bf16.mxu0 0
        %1296 = vmatpush1.bf16.msra.mxu0 0
        %1297 = vmatprep.subr.bf16.mxu0 0
        %1298 = vmatpush1.bf16.msra.mxu0 0
        %1299 = vmatprep.subr.bf16.mxu0 0
        %1300 = vmatpush1.bf16.msra.mxu0 0
        %1301 = vmatprep.subr.bf16.mxu0 0
        %1302 = vmatpush1.bf16.msra.mxu0 0
        %1303 = vmatprep.subr.bf16.mxu0 0
        %1304 = vmatpush1.bf16.msra.mxu0 0
        %1305 = vmatprep.subr.bf16.mxu0 0
        %1306 = vmatpush1.bf16.msra.mxu0 0
        %1307 = vmatprep.subr.bf16.mxu0 0
        %1308 = vmatpush1.bf16.msra.mxu0 0
        %1309 = vmatprep.subr.bf16.mxu0 0
        %1310 = vmatpush1.bf16.msra.mxu0 0
        %1311 = vmatprep.subr.bf16.mxu0 0
        %1312 = vmatpush1.bf16.msra.mxu0 0
        %1313 = vmatprep.subr.bf16.mxu0 0
        %1314 = vmatpush1.bf16.msra.mxu0 0
        %1315 = vmatprep.subr.bf16.mxu0 0
        %1316 = vmatpush1.bf16.msra.mxu0 0
        %1317 = vmatprep.subr.bf16.mxu0 0
        %1318 = vmatpush1.bf16.msra.mxu0 0
        %1319 = vmatprep.mubr.bf16.mxu0 0
        %1320 = vmatmul.mubr.bf16.gmra.mrb[0].mxu0 %v973
        %v1321 = vpop.f32.mrb[0].mxu0
        %v1322 = vadd.f32 %v1225, %v1321
        %v1323 = vpop.f32.mrb[0].mxu0
        %v1324 = vpop.f32.mrb[0].mxu0
        %v1325 = vadd.f32 %v1228, %v1324
        %v1326 = vpop.f32.mrb[0].mxu0
        %1327 = vmatprep.mubr.bf16.mxu0 0
        %1328 = vmatmul.mubr.bf16.gmra.mrb[0].mxu0 %v976
        %v1329 = vpop.f32.mrb[0].mxu0
        %v1330 = vadd.f32 %v1233, %v1329
        %v1331 = vpop.f32.mrb[0].mxu0
        %v1332 = vpop.f32.mrb[0].mxu0
        %v1333 = vadd.f32 %v1236, %v1332
        %v1334 = vpop.f32.mrb[0].mxu0
        %1335 = vmatprep.mubr.bf16.mxu0 0
        %1336 = vmatmul.mubr.bf16.gmra.mrb[0].mxu0 %v979
        %v1337 = vpop.f32.mrb[0].mxu0
        %v1338 = vadd.f32 %v1241, %v1337
        %v1339 = vpop.f32.mrb[0].mxu0
        %v1340 = vpop.f32.mrb[0].mxu0
        %v1341 = vadd.f32 %v1244, %v1340
        %v1342 = vpop.f32.mrb[0].mxu0
        %1343 = vmatprep.mubr.bf16.mxu0 0
        %1344 = vmatmul.mubr.bf16.gmra.mrb[0].mxu0 %v982
        %v1345 = vpop.f32.mrb[0].mxu0
        %v1346 = vadd.f32 %v1249, %v1345
        %v1347 = vpop.f32.mrb[0].mxu0
        %v1348 = vpop.f32.mrb[0].mxu0
        %v1349 = vadd.f32 %v1252, %v1348
        %v1350 = vpop.f32.mrb[0].mxu0
        %1351 = vmatprep.mubr.bf16.mxu0 0
        %1352 = vmatmul.mubr.bf16.gmra.mrb[0].mxu0 %v985
        %v1353 = vpop.f32.mrb[0].mxu0
        %v1354 = vadd.f32 %v1257, %v1353
        %v1355 = vpop.f32.mrb[0].mxu0
        %v1356 = vpop.f32.mrb[0].mxu0
        %v1357 = vadd.f32 %v1260, %v1356
        %v1358 = vpop.f32.mrb[0].mxu0
        %1359 = vmatprep.mubr.bf16.mxu0 0
        %1360 = vmatmul.mubr.bf16.gmra.mrb[0].mxu0 %v988
        %v1361 = vpop.f32.mrb[0].mxu0
        %v1362 = vadd.f32 %v1265, %v1361
        %v1363 = vpop.f32.mrb[0].mxu0
        %v1364 = vpop.f32.mrb[0].mxu0
        %v1365 = vadd.f32 %v1268, %v1364
        %v1366 = vpop.f32.mrb[0].mxu0
        %1367 = vmatprep.mubr.bf16.mxu0 0
        %1368 = vmatmul.mubr.bf16.gmra.mrb[0].mxu0 %v991
        %v1369 = vpop.f32.mrb[0].mxu0
        %v1370 = vadd.f32 %v1273, %v1369
        %v1371 = vpop.f32.mrb[0].mxu0
        %v1372 = vpop.f32.mrb[0].mxu0
        %v1373 = vadd.f32 %v1276, %v1372
        %v1374 = vpop.f32.mrb[0].mxu0
        %1375 = vmatprep.mubr.bf16.mxu0 0
        %1376 = vmatmul.mubr.bf16.gmra.mrb[0].mxu0 %v994
        %v1377 = vpop.f32.mrb[0].mxu0
        %v1378 = vadd.f32 %v1281, %v1377
        %v1379 = vpop.f32.mrb[0].mxu0
        %v1380 = vpop.f32.mrb[0].mxu0
        %v1381 = vadd.f32 %v1284, %v1380
        %v1382 = vpop.f32.mrb[0].mxu0
        %1383 = vdwg.mxu0
        %v1384 = vmax.f32 %v1322, 0.0
        %v1385 = vmax.f32 %v1325, 0.0
        %v1386 = vmax.f32 %v1330, 0.0
        %v1387 = vmax.f32 %v1333, 0.0
        %v1388 = vmax.f32 %v1338, 0.0
        %v1389 = vmax.f32 %v1341, 0.0
        %v1390 = vmax.f32 %v1346, 0.0
        %v1391 = vmax.f32 %v1349, 0.0
        %v1392 = vmax.f32 %v1354, 0.0
        %v1393 = vmax.f32 %v1357, 0.0
        %v1394 = vmax.f32 %v1362, 0.0
        %v1395 = vmax.f32 %v1365, 0.0
        %v1396 = vmax.f32 %v1370, 0.0
        %v1397 = vmax.f32 %v1373, 0.0
        %v1398 = vmax.f32 %v1378, 0.0
        %v1399 = vmax.f32 %v1381, 0.0
        %v1400 = vpack.c.bf16 %v1385, %v1384
        %v1401 = vpack.c.bf16 %v1387, %v1386
        %v1402 = vpack.c.bf16 %v1389, %v1388
        %v1403 = vpack.c.bf16 %v1391, %v1390
        %v1404 = vpack.c.bf16 %v1393, %v1392
        %v1405 = vpack.c.bf16 %v1395, %v1394
        %v1406 = vpack.c.bf16 %v1397, %v1396
        %v1407 = vpack.c.bf16 %v1399, %v1398
        %v1408 = vld [vmem:[%s2] sm:$0xf]
        %v1409 = vld [vmem:[%s2 + $0x4] sm:$0xf]
        %v1410 = vld [vmem:[%s2 + $0x8] sm:$0xf]
        %v1411 = vld [vmem:[%s2 + $0xc] sm:$0xf]
        %v1412 = vld [vmem:[%s2 + $0x10] sm:$0xf]
        %v1413 = vld [vmem:[%s2 + $0x14] sm:$0xf]
        %v1414 = vld [vmem:[%s2 + $0x18] sm:$0xf]
        %v1415 = vld [vmem:[%s2 + $0x1c] sm:$0xf]
        %v1416 = vld [vmem:[%s2 + $0x20] sm:$0xf]
        %v1417 = vld [vmem:[%s2 + $0x24] sm:$0xf]
        %v1418 = vld [vmem:[%s2 + $0x28] sm:$0xf]
        %v1419 = vld [vmem:[%s2 + $0x2c] sm:$0xf]
        %v1420 = vld [vmem:[%s2 + $0x30] sm:$0xf]
        %v1421 = vld [vmem:[%s2 + $0x34] sm:$0xf]
        %v1422 = vld [vmem:[%s2 + $0x38] sm:$0xf]
        %v1423 = vld [vmem:[%s2 + $0x3c] sm:$0xf]
        %v1424 = vlaneseq
        %v1425 = vshrl.u32 %v1424, 7
        %v1426 = vsub.s32 1, %v1425
        %v1427 = vrot.slane %v294, %v1426
        %v1444 = vunpack.c.l.b16 %v1408
        %v1445 = vunpack.c.l.b16 %v1409
        %v1446 = vunpack.c.l.b16 %v1410
        %v1447 = vunpack.c.l.b16 %v1411
        %v1448 = vunpack.c.l.b16 %v1412
        %v1449 = vunpack.c.l.b16 %v1413
        %v1450 = vunpack.c.l.b16 %v1414
        %v1451 = vunpack.c.l.b16 %v1415
        %v1452 = vunpack.c.l.b16 %v1416
        %v1453 = vunpack.c.l.b16 %v1417
        %v1454 = vunpack.c.l.b16 %v1418
        %v1455 = vunpack.c.l.b16 %v1419
        %v1456 = vunpack.c.l.b16 %v1420
        %v1457 = vunpack.c.l.b16 %v1421
        %v1458 = vunpack.c.l.b16 %v1422
        %v1459 = vunpack.c.l.b16 %v1423
        %v1460 = vpack.c.b16 %v1445, %v1444
        %v1461 = vpack.c.b16 %v1447, %v1446
        %v1462 = vpack.c.b16 %v1449, %v1448
        %v1463 = vpack.c.b16 %v1451, %v1450
        %v1464 = vpack.c.b16 %v1453, %v1452
        %v1465 = vpack.c.b16 %v1455, %v1454
        %v1466 = vpack.c.b16 %v1457, %v1456
        %v1467 = vpack.c.b16 %v1459, %v1458
        %1476 = vmatprep.subr.bf16.mxu0 0
        %1477 = vmatpush1.bf16.msra.mxu0 %v1460
        %1478 = vmatprep.subr.bf16.mxu0 0
        %1479 = vmatpush1.bf16.msra.mxu0 %v1461
        %1480 = vmatprep.subr.bf16.mxu0 0
        %1481 = vmatpush1.bf16.msra.mxu0 %v1462
        %1482 = vmatprep.subr.bf16.mxu0 0
        %1483 = vmatpush1.bf16.msra.mxu0 %v1463
        %1484 = vmatprep.subr.bf16.mxu0 0
        %1485 = vmatpush1.bf16.msra.mxu0 %v1464
        %1486 = vmatprep.subr.bf16.mxu0 0
        %1487 = vmatpush1.bf16.msra.mxu0 %v1465
        %1488 = vmatprep.subr.bf16.mxu0 0
        %1489 = vmatpush1.bf16.msra.mxu0 %v1466
        %1490 = vmatprep.subr.bf16.mxu0 0
        %1491 = vmatpush1.bf16.msra.mxu0 %v1467
        %1492 = vmatprep.subr.bf16.mxu0 0
        %1493 = vmatpush1.bf16.msra.mxu0 0
        %1494 = vmatprep.subr.bf16.mxu0 0
        %1495 = vmatpush1.bf16.msra.mxu0 0
        %1496 = vmatprep.subr.bf16.mxu0 0
        %1497 = vmatpush1.bf16.msra.mxu0 0
        %1498 = vmatprep.subr.bf16.mxu0 0
        %1499 = vmatpush1.bf16.msra.mxu0 0
        %1500 = vmatprep.subr.bf16.mxu0 0
        %1501 = vmatpush1.bf16.msra.mxu0 0
        %1502 = vmatprep.subr.bf16.mxu0 0
        %1503 = vmatpush1.bf16.msra.mxu0 0
        %1504 = vmatprep.subr.bf16.mxu0 0
        %1505 = vmatpush1.bf16.msra.mxu0 0
        %1506 = vmatprep.subr.bf16.mxu0 0
        %1507 = vmatpush1.bf16.msra.mxu0 0
        %1508 = vmatprep.mubr.bf16.mxu0 0
        %1509 = vmatmul.mubr.bf16.gmra.mrb[0].mxu0 %v1400
        %v1510 = vpop.f32.mrb[0].mxu0
        %v1511 = vadd.f32 %v1427, %v1510
        %v1512 = vpop.f32.mrb[0].mxu0
        %v1513 = vpop.f32.mrb[0].mxu0
        %v1514 = vadd.f32 %v1427, %v1513
        %v1515 = vpop.f32.mrb[0].mxu0
        %1516 = vmatprep.mubr.bf16.mxu0 0
        %1517 = vmatmul.mubr.bf16.gmra.mrb[0].mxu0 %v1401
        %v1518 = vpop.f32.mrb[0].mxu0
        %v1519 = vadd.f32 %v1427, %v1518
        %v1520 = vpop.f32.mrb[0].mxu0
        %v1521 = vpop.f32.mrb[0].mxu0
        %v1522 = vadd.f32 %v1427, %v1521
        %v1523 = vpop.f32.mrb[0].mxu0
        %1524 = vmatprep.mubr.bf16.mxu0 0
        %1525 = vmatmul.mubr.bf16.gmra.mrb[0].mxu0 %v1402
        %v1526 = vpop.f32.mrb[0].mxu0
        %v1527 = vadd.f32 %v1427, %v1526
        %v1528 = vpop.f32.mrb[0].mxu0
        %v1529 = vpop.f32.mrb[0].mxu0
        %v1530 = vadd.f32 %v1427, %v1529
        %v1531 = vpop.f32.mrb[0].mxu0
        %1532 = vmatprep.mubr.bf16.mxu0 0
        %1533 = vmatmul.mubr.bf16.gmra.mrb[0].mxu0 %v1403
        %v1534 = vpop.f32.mrb[0].mxu0
        %v1535 = vadd.f32 %v1427, %v1534
        %v1536 = vpop.f32.mrb[0].mxu0
        %v1537 = vpop.f32.mrb[0].mxu0
        %v1538 = vadd.f32 %v1427, %v1537
        %v1539 = vpop.f32.mrb[0].mxu0
        %1540 = vmatprep.mubr.bf16.mxu0 0
        %1541 = vmatmul.mubr.bf16.gmra.mrb[0].mxu0 %v1404
        %v1542 = vpop.f32.mrb[0].mxu0
        %v1543 = vadd.f32 %v1427, %v1542
        %v1544 = vpop.f32.mrb[0].mxu0
        %v1545 = vpop.f32.mrb[0].mxu0
        %v1546 = vadd.f32 %v1427, %v1545
        %v1547 = vpop.f32.mrb[0].mxu0
        %1548 = vmatprep.mubr.bf16.mxu0 0
        %1549 = vmatmul.mubr.bf16.gmra.mrb[0].mxu0 %v1405
        %v1550 = vpop.f32.mrb[0].mxu0
        %v1551 = vadd.f32 %v1427, %v1550
        %v1552 = vpop.f32.mrb[0].mxu0
        %v1553 = vpop.f32.mrb[0].mxu0
        %v1554 = vadd.f32 %v1427, %v1553
        %v1555 = vpop.f32.mrb[0].mxu0
        %1556 = vmatprep.mubr.bf16.mxu0 0
        %1557 = vmatmul.mubr.bf16.gmra.mrb[0].mxu0 %v1406
        %v1558 = vpop.f32.mrb[0].mxu0
        %v1559 = vadd.f32 %v1427, %v1558
        %v1560 = vpop.f32.mrb[0].mxu0
        %v1561 = vpop.f32.mrb[0].mxu0
        %v1562 = vadd.f32 %v1427, %v1561
        %v1563 = vpop.f32.mrb[0].mxu0
        %1564 = vmatprep.mubr.bf16.mxu0 0
        %1565 = vmatmul.mubr.bf16.gmra.mrb[0].mxu0 %v1407
        %v1566 = vpop.f32.mrb[0].mxu0
        %v1567 = vadd.f32 %v1427, %v1566
        %v1568 = vpop.f32.mrb[0].mxu0
        %v1569 = vpop.f32.mrb[0].mxu0
        %v1570 = vadd.f32 %v1427, %v1569
        %v1571 = vpop.f32.mrb[0].mxu0
        %1572 = vdwg.mxu0
        %v1573 = vmax.f32 %v1511, 0.0
        %v1574 = vmax.f32 %v1514, 0.0
        %v1575 = vmax.f32 %v1519, 0.0
        %v1576 = vmax.f32 %v1522, 0.0
        %v1577 = vmax.f32 %v1527, 0.0
        %v1578 = vmax.f32 %v1530, 0.0
        %v1579 = vmax.f32 %v1535, 0.0
        %v1580 = vmax.f32 %v1538, 0.0
        %v1581 = vmax.f32 %v1543, 0.0
        %v1582 = vmax.f32 %v1546, 0.0
        %v1583 = vmax.f32 %v1551, 0.0
        %v1584 = vmax.f32 %v1554, 0.0
        %v1585 = vmax.f32 %v1559, 0.0
        %v1586 = vmax.f32 %v1562, 0.0
        %v1587 = vmax.f32 %v1567, 0.0
        %v1588 = vmax.f32 %v1570, 0.0
        %v1589 = vpack.c.bf16 %v1574, %v1573
        %v1590 = vpack.c.bf16 %v1576, %v1575
        %v1591 = vpack.c.bf16 %v1578, %v1577
        %v1592 = vpack.c.bf16 %v1580, %v1579
        %v1593 = vpack.c.bf16 %v1582, %v1581
        %v1594 = vpack.c.bf16 %v1584, %v1583
        %v1595 = vpack.c.bf16 %v1586, %v1585
        %v1596 = vpack.c.bf16 %v1588, %v1587
        %v1597 = vld [vmem:[%s3] sm:$0xf]
        %v1598 = vld [vmem:[%s3 + $0x4] sm:$0xf]
        %v1599 = vld [vmem:[%s3 + $0x8] sm:$0xf]
        %v1600 = vld [vmem:[%s3 + $0xc] sm:$0xf]
        %v1601 = vld [vmem:[%s3 + $0x10] sm:$0xf]
        %v1602 = vld [vmem:[%s3 + $0x14] sm:$0xf]
        %v1603 = vld [vmem:[%s3 + $0x18] sm:$0xf]
        %v1604 = vld [vmem:[%s3 + $0x1c] sm:$0xf]
        %v1605 = vld [vmem:[%s3 + $0x20] sm:$0xf]
        %v1606 = vld [vmem:[%s3 + $0x24] sm:$0xf]
        %v1607 = vld [vmem:[%s3 + $0x28] sm:$0xf]
        %v1608 = vld [vmem:[%s3 + $0x2c] sm:$0xf]
        %v1609 = vld [vmem:[%s3 + $0x30] sm:$0xf]
        %v1610 = vld [vmem:[%s3 + $0x34] sm:$0xf]
        %v1611 = vld [vmem:[%s3 + $0x38] sm:$0xf]
        %v1612 = vld [vmem:[%s3 + $0x3c] sm:$0xf]
        %v1613 = vlaneseq
        %v1614 = vshrl.u32 %v1613, 7
        %v1615 = vsub.s32 2, %v1614
        %v1616 = vrot.slane %v294, %v1615
        %v1633 = vunpack.c.l.b16 %v1597
        %v1634 = vunpack.c.l.b16 %v1598
        %v1635 = vunpack.c.l.b16 %v1599
        %v1636 = vunpack.c.l.b16 %v1600
        %v1637 = vunpack.c.l.b16 %v1601
        %v1638 = vunpack.c.l.b16 %v1602
        %v1639 = vunpack.c.l.b16 %v1603
        %v1640 = vunpack.c.l.b16 %v1604
        %v1641 = vunpack.c.l.b16 %v1605
        %v1642 = vunpack.c.l.b16 %v1606
        %v1643 = vunpack.c.l.b16 %v1607
        %v1644 = vunpack.c.l.b16 %v1608
        %v1645 = vunpack.c.l.b16 %v1609
        %v1646 = vunpack.c.l.b16 %v1610
        %v1647 = vunpack.c.l.b16 %v1611
        %v1648 = vunpack.c.l.b16 %v1612
        %v1649 = vpack.c.b16 %v1634, %v1633
        %v1650 = vpack.c.b16 %v1636, %v1635
        %v1651 = vpack.c.b16 %v1638, %v1637
        %v1652 = vpack.c.b16 %v1640, %v1639
        %v1653 = vpack.c.b16 %v1642, %v1641
        %v1654 = vpack.c.b16 %v1644, %v1643
        %v1655 = vpack.c.b16 %v1646, %v1645
        %v1656 = vpack.c.b16 %v1648, %v1647
        %1665 = vmatprep.subr.bf16.mxu0 0
        %1666 = vmatpush1.bf16.msra.mxu0 %v1649
        %1667 = vmatprep.subr.bf16.mxu0 0
        %1668 = vmatpush1.bf16.msra.mxu0 %v1650
        %1669 = vmatprep.subr.bf16.mxu0 0
        %1670 = vmatpush1.bf16.msra.mxu0 %v1651
        %1671 = vmatprep.subr.bf16.mxu0 0
        %1672 = vmatpush1.bf16.msra.mxu0 %v1652
        %1673 = vmatprep.subr.bf16.mxu0 0
        %1674 = vmatpush1.bf16.msra.mxu0 %v1653
        %1675 = vmatprep.subr.bf16.mxu0 0
        %1676 = vmatpush1.bf16.msra.mxu0 %v1654
        %1677 = vmatprep.subr.bf16.mxu0 0
        %1678 = vmatpush1.bf16.msra.mxu0 %v1655
        %1679 = vmatprep.subr.bf16.mxu0 0
        %1680 = vmatpush1.bf16.msra.mxu0 %v1656
        %1681 = vmatprep.subr.bf16.mxu0 0
        %1682 = vmatpush1.bf16.msra.mxu0 0
        %1683 = vmatprep.subr.bf16.mxu0 0
        %1684 = vmatpush1.bf16.msra.mxu0 0
        %1685 = vmatprep.subr.bf16.mxu0 0
        %1686 = vmatpush1.bf16.msra.mxu0 0
        %1687 = vmatprep.subr.bf16.mxu0 0
        %1688 = vmatpush1.bf16.msra.mxu0 0
        %1689 = vmatprep.subr.bf16.mxu0 0
        %1690 = vmatpush1.bf16.msra.mxu0 0
        %1691 = vmatprep.subr.bf16.mxu0 0
        %1692 = vmatpush1.bf16.msra.mxu0 0
        %1693 = vmatprep.subr.bf16.mxu0 0
        %1694 = vmatpush1.bf16.msra.mxu0 0
        %1695 = vmatprep.subr.bf16.mxu0 0
        %1696 = vmatpush1.bf16.msra.mxu0 0
        %1697 = vmatprep.mubr.bf16.mxu0 0
        %1698 = vmatmul.mubr.bf16.gmra.mrb[0].mxu0 %v1589
        %v1699 = vpop.f32.mrb[0].mxu0
        %v1700 = vadd.f32 %v1616, %v1699
        %v1701 = vpop.f32.mrb[0].mxu0
        %v1702 = vpop.f32.mrb[0].mxu0
        %v1703 = vadd.f32 %v1616, %v1702
        %v1704 = vpop.f32.mrb[0].mxu0
        %1705 = vmatprep.mubr.bf16.mxu0 0
        %1706 = vmatmul.mubr.bf16.gmra.mrb[0].mxu0 %v1590
        %v1707 = vpop.f32.mrb[0].mxu0
        %v1708 = vadd.f32 %v1616, %v1707
        %v1709 = vpop.f32.mrb[0].mxu0
        %v1710 = vpop.f32.mrb[0].mxu0
        %v1711 = vadd.f32 %v1616, %v1710
        %v1712 = vpop.f32.mrb[0].mxu0
        %1713 = vmatprep.mubr.bf16.mxu0 0
        %1714 = vmatmul.mubr.bf16.gmra.mrb[0].mxu0 %v1591
        %v1715 = vpop.f32.mrb[0].mxu0
        %v1716 = vadd.f32 %v1616, %v1715
        %v1717 = vpop.f32.mrb[0].mxu0
        %v1718 = vpop.f32.mrb[0].mxu0
        %v1719 = vadd.f32 %v1616, %v1718
        %v1720 = vpop.f32.mrb[0].mxu0
        %1721 = vmatprep.mubr.bf16.mxu0 0
        %1722 = vmatmul.mubr.bf16.gmra.mrb[0].mxu0 %v1592
        %v1723 = vpop.f32.mrb[0].mxu0
        %v1724 = vadd.f32 %v1616, %v1723
        %v1725 = vpop.f32.mrb[0].mxu0
        %v1726 = vpop.f32.mrb[0].mxu0
        %v1727 = vadd.f32 %v1616, %v1726
        %v1728 = vpop.f32.mrb[0].mxu0
        %1729 = vmatprep.mubr.bf16.mxu0 0
        %1730 = vmatmul.mubr.bf16.gmra.mrb[0].mxu0 %v1593
        %v1731 = vpop.f32.mrb[0].mxu0
        %v1732 = vadd.f32 %v1616, %v1731
        %v1733 = vpop.f32.mrb[0].mxu0
        %v1734 = vpop.f32.mrb[0].mxu0
        %v1735 = vadd.f32 %v1616, %v1734
        %v1736 = vpop.f32.mrb[0].mxu0
        %1737 = vmatprep.mubr.bf16.mxu0 0
        %1738 = vmatmul.mubr.bf16.gmra.mrb[0].mxu0 %v1594
        %v1739 = vpop.f32.mrb[0].mxu0
        %v1740 = vadd.f32 %v1616, %v1739
        %v1741 = vpop.f32.mrb[0].mxu0
        %v1742 = vpop.f32.mrb[0].mxu0
        %v1743 = vadd.f32 %v1616, %v1742
        %v1744 = vpop.f32.mrb[0].mxu0
        %1745 = vmatprep.mubr.bf16.mxu0 0
        %1746 = vmatmul.mubr.bf16.gmra.mrb[0].mxu0 %v1595
        %v1747 = vpop.f32.mrb[0].mxu0
        %v1748 = vadd.f32 %v1616, %v1747
        %v1749 = vpop.f32.mrb[0].mxu0
        %v1750 = vpop.f32.mrb[0].mxu0
        %v1751 = vadd.f32 %v1616, %v1750
        %v1752 = vpop.f32.mrb[0].mxu0
        %1753 = vmatprep.mubr.bf16.mxu0 0
        %1754 = vmatmul.mubr.bf16.gmra.mrb[0].mxu0 %v1596
        %v1755 = vpop.f32.mrb[0].mxu0
        %v1756 = vadd.f32 %v1616, %v1755
        %v1757 = vpop.f32.mrb[0].mxu0
        %v1758 = vpop.f32.mrb[0].mxu0
        %v1759 = vadd.f32 %v1616, %v1758
        %v1760 = vpop.f32.mrb[0].mxu0
        %1761 = vdwg.mxu0
        %1762 = vst [vmem:[%s220] sm:$0xff] %v1700
        %1763 = vst [vmem:[%s220 + $0x8] sm:$0xff] %v1703
        %1764 = vst [vmem:[%s220 + $0x10] sm:$0xff] %v1708
        %1765 = vst [vmem:[%s220 + $0x18] sm:$0xff] %v1711
        %1766 = vst [vmem:[%s220 + $0x20] sm:$0xff] %v1716
        %1767 = vst [vmem:[%s220 + $0x28] sm:$0xff] %v1719
        %1768 = vst [vmem:[%s220 + $0x30] sm:$0xff] %v1724
        %1769 = vst [vmem:[%s220 + $0x38] sm:$0xff] %v1727
        %1770 = vst [vmem:[%s220 + $0x40] sm:$0xff] %v1732
        %1771 = vst [vmem:[%s220 + $0x48] sm:$0xff] %v1735
        %1772 = vst [vmem:[%s220 + $0x50] sm:$0xff] %v1740
        %1773 = vst [vmem:[%s220 + $0x58] sm:$0xff] %v1743
        %1774 = vst [vmem:[%s220 + $0x60] sm:$0xff] %v1748
        %1775 = vst [vmem:[%s220 + $0x68] sm:$0xff] %v1751
        %1776 = vst [vmem:[%s220 + $0x70] sm:$0xff] %v1756
        %1777 = vst [vmem:[%s220 + $0x78] sm:$0xff] %v1759
        %s1778 = sand.u32 %s137, 1
        %s1779 = scalar_lea.sflag [#allocation3], %s1778
        %s1780 = sand.u32 %s137, 1
        %s1781 = smul.addr %s1780, 128
        %s1782 = scalar_lea.vmem [#allocation2], %s1781
        // Predicated region
        $region41: #{tpu_custom_call.1} parent=39 // pred_check
          %p1783 = pneg %p147
        $region42: #{tpu_custom_call.1} parent=39 // pred_check_branch
          %1785 = sbr.rel (%p1783) target = $region44
        $region43: #{tpu_custom_call.1} parent=39 // pred_region
          %s1786 = smul.u32 16, %s19
          %s1788 = ssub.s32 2048, 2048
          %1789 = vsyncadd %s1779, %s1788
          %s1790 = smul.addr %s1786, 128
          %s1791 = scalar_lea.hbm %s5, %s1790
          %s1792 = sshll.u32 %s1782, 4
          %s1793 = int_to_ptr.vmem [resolvable:$true] %s1792
          %1798 = dma.vmem_to_hbm [thread:$0]  %s1793, 2048, %s1791, %s1779, 128, 128, 8
        $region44: #{tpu_custom_call.1} parent=39 // pred_fallthru
          _
      $region40: #{tpu_custom_call.1} parent=5 // pred_fallthru
        _
      %p1799 = scmp.le.s32.totalorder 2, %s14
      // Predicated region
      $region45: #{tpu_custom_call.1} parent=5 // pred_check
        %p1800 = pneg %p1799
      $region46: #{tpu_custom_call.1} parent=5 // pred_check_branch
        %1802 = sbr.rel (%p1800) target = $region48
      $region47: #{tpu_custom_call.1} parent=5 // pred_region
        %s1803 = ssub.s32 %s14, 2
        // Predicated region
        $region49: #{tpu_custom_call.1} parent=47 // pred_check
          %p1804 = pneg %p153
        $region50: #{tpu_custom_call.1} parent=47 // pred_check_branch
          %1806 = sbr.rel (%p1804) target = $region52
        $region51: #{tpu_custom_call.1} parent=47 // pred_region
          %s1807 = sand.u32 %s138, 1
          %s1808 = scalar_lea.sflag [#allocation3], %s1807
          %s1809 = sand.u32 %s138, 1
          %s1810 = smul.addr %s1809, 128
          %s1811 = scalar_lea.vmem [#allocation2], %s1810
          %1812 = dma.done %s1808, 2048
        $region52: #{tpu_custom_call.1} parent=47 // pred_fallthru
          _
      $region48: #{tpu_custom_call.1} parent=5 // pred_fallthru
        _
    $region6: #{tpu_custom_call.1} parent=1 // loop_footer
      %s18 = sadd.s32 1, %s14
    $region7: #{tpu_custom_call.1} parent=1 // loop_footer_branch
      %13 = sbr.rel target = $region3
    $region8: #{tpu_custom_call.1} parent=1 // loop_exit
      _
    %1813 = vsyncpa [#allocation3], 1
    %s1814 = scalar_lea.sflag [#allocation3], 1
    %1815 = vsyncpa %s1814, 1

</llo_original>
